<compile_context>
chip_gen: v7x
topology: tpu7x:2x2x1
jax: 0.10.0
libtpu: 0.0.40
codegen_flags: <defaults>
</compile_context>

<pallas_src>
import jax
import jax.numpy as jnp
from jax.experimental import pallas as pl
from jax.experimental.pallas import tpu as pltpu

BN_EPS = 1e-5


# ----------------------------- Pallas kernel ---------------------------------------


def _linear_bn_relu_linear(x, w1_ref, b1_ref, w2_ref, b2_ref):
    """Linear -> BatchNorm1d(train, gamma=1, beta=0) -> ReLU -> Linear, all in f32."""
    # Linear 1 (MXU). Weights arrive bf16; cast up in-vreg, accumulate in f32.
    h = jnp.dot(x, w1_ref[...].astype(jnp.float32),
                preferred_element_type=jnp.float32) + b1_ref[...]
    # BatchNorm1d training-mode batch statistics (biased variance), VPU, strictly f32.
    mean = jnp.mean(h, axis=0, keepdims=True)
    var = jnp.mean((h - mean) ** 2, axis=0, keepdims=True)
    hn = jnp.maximum((h - mean) * jax.lax.rsqrt(var + BN_EPS), 0.0)
    # Linear 2 (MXU).
    return jnp.dot(hn, w2_ref[...].astype(jnp.float32),
                   preferred_element_type=jnp.float32) + b2_ref[...]


def simsiam_kernel(x_ref,
                   pw1_ref, pb1_ref, pw2_ref, pb2_ref,   # projector weights (this stream)
                   qw1_ref, qb1_ref, qw2_ref, qb2_ref,   # predictor weights (this stream)
                   z_ref, p_ref):
    # One grid step == one stream (0: audio, 1: text); projector -> predictor fused.
    z = _linear_bn_relu_linear(x_ref[...], pw1_ref, pb1_ref, pw2_ref, pb2_ref)
    z_ref[...] = z.astype(z_ref.dtype)
    p = _linear_bn_relu_linear(z, qw1_ref, qb1_ref, qw2_ref, qb2_ref)
    p_ref[...] = p.astype(p_ref.dtype)


# ----------------------------- wrapper ----------------------------------------------


def _stream_spec(shape):
    """BlockSpec selecting stream `i` along the leading (squeezed) axis."""
    return pl.BlockSpec((None,) + tuple(shape), lambda i: (i,) + (0,) * len(shape))


@jax.jit
def simsiam_forward(audio_input, text_input, params):
    B, in_dim = audio_input.shape
    proj, pred = params["proj"], params["pred"]
    hid_proj = proj["w1"].shape[2]          # 512
    out_dim = proj["w2"].shape[2]           # 128
    hid_pred = pred["w1"].shape[2]          # 128 (padded from 64)

    # Stack the two independent streams on a leading axis the grid iterates over.
    x = jnp.stack([audio_input, text_input], axis=0)          # [2, B, 1024] f32

    # Advisory cost for XLA scheduling (latency-bound custom call).
    flops = 2 * 2 * B * (in_dim * hid_proj + hid_proj * out_dim
                         + out_dim * hid_pred + hid_pred * out_dim)
    transcendentals = 2 * (hid_proj + hid_pred)                # rsqrt per BN feature
    bytes_accessed = (
        2 * B * in_dim * 4                                     # x
        + 2 * (in_dim * hid_proj + hid_proj * out_dim) * 2     # projector bf16 weights
        + 2 * (out_dim * hid_pred + hid_pred * out_dim) * 2    # predictor bf16 weights
        + 2 * (hid_proj + out_dim + hid_pred + out_dim) * 4    # f32 biases
        + 2 * 2 * B * out_dim * 4                              # z, p outputs
    )

    in_specs = [
        _stream_spec((B, in_dim)),
        _stream_spec(proj["w1"].shape[1:]), _stream_spec(proj["b1"].shape[1:]),
        _stream_spec(proj["w2"].shape[1:]), _stream_spec(proj["b2"].shape[1:]),
        _stream_spec(pred["w1"].shape[1:]), _stream_spec(pred["b1"].shape[1:]),
        _stream_spec(pred["w2"].shape[1:]), _stream_spec(pred["b2"].shape[1:]),
    ]
    out_specs = (_stream_spec((B, out_dim)), _stream_spec((B, out_dim)))

    z, p = pl.pallas_call(
        simsiam_kernel,
        grid=(2,),
        in_specs=in_specs,
        out_specs=out_specs,
        out_shape=(jax.ShapeDtypeStruct((2, B, out_dim), jnp.float32),
                   jax.ShapeDtypeStruct((2, B, out_dim), jnp.float32)),
        compiler_params=pltpu.CompilerParams(dimension_semantics=("parallel",)),
        cost_estimate=pl.CostEstimate(flops=int(flops),
                                      transcendentals=int(transcendentals),
                                      bytes_accessed=int(bytes_accessed)),
    )(x, proj["w1"], proj["b1"], proj["w2"], proj["b2"],
      pred["w1"], pred["b1"], pred["w2"], pred["b2"])

    p_a, p_t = p[0], p[1]
    z_a, z_t = z[0], z[1]
    # .detach() in forward is value-identity; stop_gradient for semantic parity.
    return p_a, jax.lax.stop_gradient(z_t), p_t, jax.lax.stop_gradient(z_a)


# ----------------------------- parameter init ---------------------------------------


def init_projector(key, in_dim, hidden_dim, out_dim, hidden_pad=None):
    """PyTorch-default-like init (uniform +-1/sqrt(fan_in)); optional zero-pad of hidden dim."""
    hp = hidden_dim if hidden_pad is None else hidden_pad
    k1, k2, k3, k4 = jax.random.split(key, 4)
    lim1 = 1.0 / (in_dim ** 0.5)
    lim2 = 1.0 / (hidden_dim ** 0.5)
    w1 = jax.random.uniform(k1, (in_dim, hidden_dim), jnp.float32, -lim1, lim1)
    b1 = jax.random.uniform(k2, (1, hidden_dim), jnp.float32, -lim1, lim1)
    w2 = jax.random.uniform(k3, (hidden_dim, out_dim), jnp.float32, -lim2, lim2)
    b2 = jax.random.uniform(k4, (1, out_dim), jnp.float32, -lim2, lim2)
    if hp != hidden_dim:  # zero-pad hidden dim -> lane-dense; exactly value preserving
        w1 = jnp.pad(w1, ((0, 0), (0, hp - hidden_dim)))
        b1 = jnp.pad(b1, ((0, 0), (0, hp - hidden_dim)))
        w2 = jnp.pad(w2, ((0, hp - hidden_dim), (0, 0)))
    return {"w1": w1, "b1": b1, "w2": w2, "b2": b2}


def _stack_pair(a, t):
    """Stack {audio, text} weight sets along a leading stream axis; weights -> bf16."""
    return {
        "w1": jnp.stack([a["w1"], t["w1"]]).astype(jnp.bfloat16),
        "b1": jnp.stack([a["b1"], t["b1"]]),                     # biases stay f32
        "w2": jnp.stack([a["w2"], t["w2"]]).astype(jnp.bfloat16),
        "b2": jnp.stack([a["b2"], t["b2"]]),
    }


def init_simsiam(key):
    ka, kt, kpa, kpt = jax.random.split(key, 4)
    proj_a = init_projector(ka, 1024, 512, 128)
    proj_t = init_projector(kt, 1024, 512, 128)
    pred_a = init_projector(kpa, 128, 64, 128, hidden_pad=128)
    pred_t = init_projector(kpt, 128, 64, 128, hidden_pad=128)
    return {"proj": _stack_pair(proj_a, proj_t), "pred": _stack_pair(pred_a, pred_t)}


# ----------------------------- pure-JAX reference -----------------------------------


def _ref_block(x, w1, b1, w2, b2):
    h = x @ w1.astype(jnp.float32) + b1
    mean = h.mean(0, keepdims=True)
    var = ((h - mean) ** 2).mean(0, keepdims=True)
    hn = jnp.maximum((h - mean) * jax.lax.rsqrt(var + BN_EPS), 0.0)
    return hn @ w2.astype(jnp.float32) + b2


def simsiam_reference(audio_input, text_input, params):
    proj, pred = params["proj"], params["pred"]
    xs = [audio_input, text_input]
    zs = [_ref_block(xs[i], proj["w1"][i], proj["b1"][i], proj["w2"][i], proj["b2"][i])
          for i in range(2)]
    ps = [_ref_block(zs[i], pred["w1"][i], pred["b1"][i], pred["w2"][i], pred["b2"][i])
          for i in range(2)]
    return ps[0], zs[1], ps[1], zs[0]


# ----------------------------- main --------------------------------------------------

if __name__ == "__main__":
    key = jax.random.PRNGKey(0)
    k_params, k_audio, k_text = jax.random.split(key, 3)

    B, IN_DIM = 8, 1024  # Projector() hard-codes in_dim=1024
    params = init_simsiam(k_params)
    audio_input = jax.random.normal(k_audio, (B, IN_DIM), jnp.float32)
    text_input = jax.random.normal(k_text, (B, IN_DIM), jnp.float32)

    p_a, z_t, p_t, z_a = simsiam_forward(audio_input, text_input, params)
    jax.block_until_ready((p_a, z_t, p_t, z_a))

    assert p_a.shape == (B, 128) and p_t.shape == (B, 128)
    assert z_a.shape == (B, 128) and z_t.shape == (B, 128)

    # Correctness vs pure-JAX reference (same bf16 weights; loose tol for MXU decomposition).
    r_pa, r_zt, r_pt, r_za = simsiam_reference(audio_input, text_input, params)
    for got, ref in ((p_a, r_pa), (z_t, r_zt), (p_t, r_pt), (z_a, r_za)):
        assert bool(jnp.allclose(got, ref, rtol=2e-2, atol=2e-2)), "mismatch vs reference"

    print("KERNEL_OK")
</pallas_src>

<mosaic_0001>
module attributes {stable_mosaic.version = 11 : i64} {
  func.func @simsiam_kernel(%arg0: i32, %arg1: memref<1x8x1024xf32, #tpu.memory_space<vmem>>, %arg2: memref<1x1024x512xbf16, #tpu.memory_space<vmem>>, %arg3: memref<1x1x512xf32, #tpu.memory_space<vmem>>, %arg4: memref<1x512x128xbf16, #tpu.memory_space<vmem>>, %arg5: memref<1x1x128xf32, #tpu.memory_space<vmem>>, %arg6: memref<1x128x128xbf16, #tpu.memory_space<vmem>>, %arg7: memref<1x1x128xf32, #tpu.memory_space<vmem>>, %arg8: memref<1x128x128xbf16, #tpu.memory_space<vmem>>, %arg9: memref<1x1x128xf32, #tpu.memory_space<vmem>>, %arg10: memref<1x8x128xf32, #tpu.memory_space<vmem>>, %arg11: memref<1x8x128xf32, #tpu.memory_space<vmem>>) attributes {dimension_semantics = [#tpu.dimension_semantics<parallel>], iteration_bounds = array<i64: 2>, scalar_prefetch = 0 : i64, scratch_operands = 0 : i64, tpu.core_type = #tpu.core_type<tc>, window_params = [{transform_indices = @transform_0, window_bounds = array<i64: 1, 8, 1024>}, {transform_indices = @transform_1, window_bounds = array<i64: 1, 1024, 512>}, {transform_indices = @transform_2, window_bounds = array<i64: 1, 1, 512>}, {transform_indices = @transform_3, window_bounds = array<i64: 1, 512, 128>}, {transform_indices = @transform_4, window_bounds = array<i64: 1, 1, 128>}, {transform_indices = @transform_5, window_bounds = array<i64: 1, 128, 128>}, {transform_indices = @transform_6, window_bounds = array<i64: 1, 1, 128>}, {transform_indices = @transform_7, window_bounds = array<i64: 1, 128, 128>}, {transform_indices = @transform_8, window_bounds = array<i64: 1, 1, 128>}, {transform_indices = @transform_9, window_bounds = array<i64: 1, 8, 128>}, {transform_indices = @transform_10, window_bounds = array<i64: 1, 8, 128>}]} {
    %c0 = arith.constant 0 : index
    %c0_0 = arith.constant 0 : index
    %c0_1 = arith.constant 0 : index
    %0 = vector.load %arg1[%c0, %c0_0, %c0_1] : memref<1x8x1024xf32, #tpu.memory_space<vmem>>, vector<1x8x1024xf32>
    %1 = vector.shape_cast %0 : vector<1x8x1024xf32> to vector<8x1024xf32>
    %c0_2 = arith.constant 0 : index
    %c0_3 = arith.constant 0 : index
    %c0_4 = arith.constant 0 : index
    %2 = vector.load %arg2[%c0_2, %c0_3, %c0_4] : memref<1x1024x512xbf16, #tpu.memory_space<vmem>>, vector<1x1024x512xbf16>
    %3 = vector.shape_cast %2 : vector<1x1024x512xbf16> to vector<1024x512xbf16>
    %4 = arith.extf %3 : vector<1024x512xbf16> to vector<1024x512xf32>
    %cst = arith.constant dense<0.000000e+00> : vector<8x512xf32>
    %5 = tpu.matmul %1, %4, %cst {dimension_numbers = #tpu.dot_dimension_numbers<[1], [0], [0], [1], [0, 0, 1, 1], [], []>} : vector<8x1024xf32>, vector<1024x512xf32>, vector<8x512xf32> -> vector<8x512xf32>
    %c0_5 = arith.constant 0 : index
    %c0_6 = arith.constant 0 : index
    %c0_7 = arith.constant 0 : index
    %6 = vector.load %arg3[%c0_5, %c0_6, %c0_7] : memref<1x1x512xf32, #tpu.memory_space<vmem>>, vector<1x1x512xf32>
    %7 = vector.shape_cast %6 : vector<1x1x512xf32> to vector<1x512xf32>
    %8 = vector.broadcast %7 : vector<1x512xf32> to vector<8x512xf32>
    %9 = arith.addf %5, %8 : vector<8x512xf32>
    %cst_8 = arith.constant dense<0.000000e+00> : vector<512xf32>
    %10 = vector.multi_reduction <add>, %9, %cst_8 [0] : vector<8x512xf32> to vector<512xf32>
    %11 = vector.shape_cast %10 : vector<512xf32> to vector<1x512xf32>
    %cst_9 = arith.constant 8.000000e+00 : f32
    %12 = vector.broadcast %cst_9 : f32 to vector<1x512xf32>
    %13 = arith.divf %11, %12 : vector<1x512xf32>
    %14 = vector.broadcast %13 : vector<1x512xf32> to vector<8x512xf32>
    %15 = arith.subf %9, %14 : vector<8x512xf32>
    %16 = arith.mulf %15, %15 : vector<8x512xf32>
    %cst_10 = arith.constant dense<0.000000e+00> : vector<512xf32>
    %17 = vector.multi_reduction <add>, %16, %cst_10 [0] : vector<8x512xf32> to vector<512xf32>
    %18 = vector.shape_cast %17 : vector<512xf32> to vector<1x512xf32>
    %cst_11 = arith.constant 8.000000e+00 : f32
    %19 = vector.broadcast %cst_11 : f32 to vector<1x512xf32>
    %20 = arith.divf %18, %19 : vector<1x512xf32>
    %21 = vector.broadcast %13 : vector<1x512xf32> to vector<8x512xf32>
    %22 = arith.subf %9, %21 : vector<8x512xf32>
    %cst_12 = arith.constant 9.99999974E-6 : f32
    %23 = vector.broadcast %cst_12 : f32 to vector<1x512xf32>
    %24 = arith.addf %20, %23 : vector<1x512xf32>
    %25 = math.rsqrt %24 : vector<1x512xf32>
    %26 = vector.broadcast %25 : vector<1x512xf32> to vector<8x512xf32>
    %27 = arith.mulf %22, %26 : vector<8x512xf32>
    %cst_13 = arith.constant 0.000000e+00 : f32
    %28 = vector.broadcast %cst_13 : f32 to vector<8x512xf32>
    %29 = arith.maximumf %27, %28 : vector<8x512xf32>
    %c0_14 = arith.constant 0 : index
    %c0_15 = arith.constant 0 : index
    %c0_16 = arith.constant 0 : index
    %30 = vector.load %arg4[%c0_14, %c0_15, %c0_16] : memref<1x512x128xbf16, #tpu.memory_space<vmem>>, vector<1x512x128xbf16>
    %31 = vector.shape_cast %30 : vector<1x512x128xbf16> to vector<512x128xbf16>
    %32 = arith.extf %31 : vector<512x128xbf16> to vector<512x128xf32>
    %cst_17 = arith.constant dense<0.000000e+00> : vector<8x128xf32>
    %33 = tpu.matmul %29, %32, %cst_17 {dimension_numbers = #tpu.dot_dimension_numbers<[1], [0], [0], [1], [0, 0, 1, 1], [], []>} : vector<8x512xf32>, vector<512x128xf32>, vector<8x128xf32> -> vector<8x128xf32>
    %c0_18 = arith.constant 0 : index
    %c0_19 = arith.constant 0 : index
    %c0_20 = arith.constant 0 : index
    %34 = vector.load %arg5[%c0_18, %c0_19, %c0_20] : memref<1x1x128xf32, #tpu.memory_space<vmem>>, vector<1x1x128xf32>
    %35 = vector.shape_cast %34 : vector<1x1x128xf32> to vector<1x128xf32>
    %36 = vector.broadcast %35 : vector<1x128xf32> to vector<8x128xf32>
    %37 = arith.addf %33, %36 : vector<8x128xf32>
    %c0_21 = arith.constant 0 : index
    %c0_22 = arith.constant 0 : index
    %c0_23 = arith.constant 0 : index
    %38 = vector.load %arg10[%c0_21, %c0_22, %c0_23] : memref<1x8x128xf32, #tpu.memory_space<vmem>>, vector<1x8x128xf32>
    %39 = vector.shape_cast %38 : vector<1x8x128xf32> to vector<8x128xf32>
    %40 = vector.shape_cast %37 : vector<8x128xf32> to vector<1x8x128xf32>
    tpu.vector_store %arg10[%c0_21, %c0_22, %c0_23], %40 {strides = array<i32>} : memref<1x8x128xf32, #tpu.memory_space<vmem>>, vector<1x8x128xf32>,
    %c0_24 = arith.constant 0 : index
    %c0_25 = arith.constant 0 : index
    %c0_26 = arith.constant 0 : index
    %41 = vector.load %arg6[%c0_24, %c0_25, %c0_26] : memref<1x128x128xbf16, #tpu.memory_space<vmem>>, vector<1x128x128xbf16>
    %42 = vector.shape_cast %41 : vector<1x128x128xbf16> to vector<128x128xbf16>
    %43 = arith.extf %42 : vector<128x128xbf16> to vector<128x128xf32>
    %cst_27 = arith.constant dense<0.000000e+00> : vector<8x128xf32>
    %44 = tpu.matmul %37, %43, %cst_27 {dimension_numbers = #tpu.dot_dimension_numbers<[1], [0], [0], [1], [0, 0, 1, 1], [], []>} : vector<8x128xf32>, vector<128x128xf32>, vector<8x128xf32> -> vector<8x128xf32>
    %c0_28 = arith.constant 0 : index
    %c0_29 = arith.constant 0 : index
    %c0_30 = arith.constant 0 : index
    %45 = vector.load %arg7[%c0_28, %c0_29, %c0_30] : memref<1x1x128xf32, #tpu.memory_space<vmem>>, vector<1x1x128xf32>
    %46 = vector.shape_cast %45 : vector<1x1x128xf32> to vector<1x128xf32>
    %47 = vector.broadcast %46 : vector<1x128xf32> to vector<8x128xf32>
    %48 = arith.addf %44, %47 : vector<8x128xf32>
    %cst_31 = arith.constant dense<0.000000e+00> : vector<128xf32>
    %49 = vector.multi_reduction <add>, %48, %cst_31 [0] : vector<8x128xf32> to vector<128xf32>
    %50 = vector.shape_cast %49 : vector<128xf32> to vector<1x128xf32>
    %cst_32 = arith.constant 8.000000e+00 : f32
    %51 = vector.broadcast %cst_32 : f32 to vector<1x128xf32>
    %52 = arith.divf %50, %51 : vector<1x128xf32>
    %53 = vector.broadcast %52 : vector<1x128xf32> to vector<8x128xf32>
    %54 = arith.subf %48, %53 : vector<8x128xf32>
    %55 = arith.mulf %54, %54 : vector<8x128xf32>
    %cst_33 = arith.constant dense<0.000000e+00> : vector<128xf32>
    %56 = vector.multi_reduction <add>, %55, %cst_33 [0] : vector<8x128xf32> to vector<128xf32>
    %57 = vector.shape_cast %56 : vector<128xf32> to vector<1x128xf32>
    %cst_34 = arith.constant 8.000000e+00 : f32
    %58 = vector.broadcast %cst_34 : f32 to vector<1x128xf32>
    %59 = arith.divf %57, %58 : vector<1x128xf32>
    %60 = vector.broadcast %52 : vector<1x128xf32> to vector<8x128xf32>
    %61 = arith.subf %48, %60 : vector<8x128xf32>
    %cst_35 = arith.constant 9.99999974E-6 : f32
    %62 = vector.broadcast %cst_35 : f32 to vector<1x128xf32>
    %63 = arith.addf %59, %62 : vector<1x128xf32>
    %64 = math.rsqrt %63 : vector<1x128xf32>
    %65 = vector.broadcast %64 : vector<1x128xf32> to vector<8x128xf32>
    %66 = arith.mulf %61, %65 : vector<8x128xf32>
    %cst_36 = arith.constant 0.000000e+00 : f32
    %67 = vector.broadcast %cst_36 : f32 to vector<8x128xf32>
    %68 = arith.maximumf %66, %67 : vector<8x128xf32>
    %c0_37 = arith.constant 0 : index
    %c0_38 = arith.constant 0 : index
    %c0_39 = arith.constant 0 : index
    %69 = vector.load %arg8[%c0_37, %c0_38, %c0_39] : memref<1x128x128xbf16, #tpu.memory_space<vmem>>, vector<1x128x128xbf16>
    %70 = vector.shape_cast %69 : vector<1x128x128xbf16> to vector<128x128xbf16>
    %71 = arith.extf %70 : vector<128x128xbf16> to vector<128x128xf32>
    %cst_40 = arith.constant dense<0.000000e+00> : vector<8x128xf32>
    %72 = tpu.matmul %68, %71, %cst_40 {dimension_numbers = #tpu.dot_dimension_numbers<[1], [0], [0], [1], [0, 0, 1, 1], [], []>} : vector<8x128xf32>, vector<128x128xf32>, vector<8x128xf32> -> vector<8x128xf32>
    %c0_41 = arith.constant 0 : index
    %c0_42 = arith.constant 0 : index
    %c0_43 = arith.constant 0 : index
    %73 = vector.load %arg9[%c0_41, %c0_42, %c0_43] : memref<1x1x128xf32, #tpu.memory_space<vmem>>, vector<1x1x128xf32>
    %74 = vector.shape_cast %73 : vector<1x1x128xf32> to vector<1x128xf32>
    %75 = vector.broadcast %74 : vector<1x128xf32> to vector<8x128xf32>
    %76 = arith.addf %72, %75 : vector<8x128xf32>
    %c0_44 = arith.constant 0 : index
    %c0_45 = arith.constant 0 : index
    %c0_46 = arith.constant 0 : index
    %77 = vector.load %arg11[%c0_44, %c0_45, %c0_46] : memref<1x8x128xf32, #tpu.memory_space<vmem>>, vector<1x8x128xf32>
    %78 = vector.shape_cast %77 : vector<1x8x128xf32> to vector<8x128xf32>
    %79 = vector.shape_cast %76 : vector<8x128xf32> to vector<1x8x128xf32>
    tpu.vector_store %arg11[%c0_44, %c0_45, %c0_46], %79 {strides = array<i32>} : memref<1x8x128xf32, #tpu.memory_space<vmem>>, vector<1x8x128xf32>,
    return
  }
  func.func @transform_0(%arg0: i32) -> (i32, i32, i32) {
    %c0_i32 = arith.constant 0 : i32
    %c0_i32_0 = arith.constant 0 : i32
    %c0_i32_1 = arith.constant 0 : i32
    return %arg0, %c0_i32, %c0_i32_0 : i32, i32, i32
  }
  func.func @transform_1(%arg0: i32) -> (i32, i32, i32) {
    %c0_i32 = arith.constant 0 : i32
    %c0_i32_0 = arith.constant 0 : i32
    %c0_i32_1 = arith.constant 0 : i32
    return %arg0, %c0_i32, %c0_i32_0 : i32, i32, i32
  }
  func.func @transform_2(%arg0: i32) -> (i32, i32, i32) {
    %c0_i32 = arith.constant 0 : i32
    %c0_i32_0 = arith.constant 0 : i32
    %c0_i32_1 = arith.constant 0 : i32
    return %arg0, %c0_i32, %c0_i32_0 : i32, i32, i32
  }
  func.func @transform_3(%arg0: i32) -> (i32, i32, i32) {
    %c0_i32 = arith.constant 0 : i32
    %c0_i32_0 = arith.constant 0 : i32
    %c0_i32_1 = arith.constant 0 : i32
    return %arg0, %c0_i32, %c0_i32_0 : i32, i32, i32
  }
  func.func @transform_4(%arg0: i32) -> (i32, i32, i32) {
    %c0_i32 = arith.constant 0 : i32
    %c0_i32_0 = arith.constant 0 : i32
    %c0_i32_1 = arith.constant 0 : i32
    return %arg0, %c0_i32, %c0_i32_0 : i32, i32, i32
  }
  func.func @transform_5(%arg0: i32) -> (i32, i32, i32) {
    %c0_i32 = arith.constant 0 : i32
    %c0_i32_0 = arith.constant 0 : i32
    %c0_i32_1 = arith.constant 0 : i32
    return %arg0, %c0_i32, %c0_i32_0 : i32, i32, i32
  }
  func.func @transform_6(%arg0: i32) -> (i32, i32, i32) {
    %c0_i32 = arith.constant 0 : i32
    %c0_i32_0 = arith.constant 0 : i32
    %c0_i32_1 = arith.constant 0 : i32
    return %arg0, %c0_i32, %c0_i32_0 : i32, i32, i32
  }
  func.func @transform_7(%arg0: i32) -> (i32, i32, i32) {
    %c0_i32 = arith.constant 0 : i32
    %c0_i32_0 = arith.constant 0 : i32
    %c0_i32_1 = arith.constant 0 : i32
    return %arg0, %c0_i32, %c0_i32_0 : i32, i32, i32
  }
  func.func @transform_8(%arg0: i32) -> (i32, i32, i32) {
    %c0_i32 = arith.constant 0 : i32
    %c0_i32_0 = arith.constant 0 : i32
    %c0_i32_1 = arith.constant 0 : i32
    return %arg0, %c0_i32, %c0_i32_0 : i32, i32, i32
  }
  func.func @transform_9(%arg0: i32) -> (i32, i32, i32) {
    %c0_i32 = arith.constant 0 : i32
    %c0_i32_0 = arith.constant 0 : i32
    %c0_i32_1 = arith.constant 0 : i32
    return %arg0, %c0_i32, %c0_i32_0 : i32, i32, i32
  }
  func.func @transform_10(%arg0: i32) -> (i32, i32, i32) {
    %c0_i32 = arith.constant 0 : i32
    %c0_i32_0 = arith.constant 0 : i32
    %c0_i32_1 = arith.constant 0 : i32
    return %arg0, %c0_i32, %c0_i32_0 : i32, i32, i32
  }
}

</mosaic_0001>

<llo_original>
// kernel: simsiam_forward.1
$region0: #{simsiam_forward.1}
  #allocation0 [shape = 'u32[]', space=smem, size = 0x4, offset = 0x4, fixed_abs, tag = 'smem constant byte address 0x4 - core index']
  #allocation1 [shape = 'u32[144,128]{1,0:T(1,128)}', space=vmem, size = 0x12000, scoped, tag = 'internal scratch']
  %s0 = inlined_call_operand.vmem [shape: f32[2,8,1024], index: 0, kind: input, shape index: {}]
  %s1 = inlined_call_operand.hbm [shape: bf16[2,1024,512], index: 1, kind: input, shape index: {}]
  %s2 = inlined_call_operand.hbm [shape: f32[2,1,512], index: 2, kind: input, shape index: {}]
  %s3 = inlined_call_operand.hbm [shape: bf16[2,512,128], index: 3, kind: input, shape index: {}]
  %s4 = inlined_call_operand.hbm [shape: f32[2,1,128], index: 4, kind: input, shape index: {}]
  %s5 = inlined_call_operand.hbm [shape: bf16[2,128,128], index: 5, kind: input, shape index: {}]
  %s6 = inlined_call_operand.hbm [shape: f32[2,1,128], index: 6, kind: input, shape index: {}]
  %s7 = inlined_call_operand.hbm [shape: bf16[2,128,128], index: 7, kind: input, shape index: {}]
  %s8 = inlined_call_operand.hbm [shape: f32[2,1,128], index: 8, kind: input, shape index: {}]
  %s9 = inlined_call_operand.vmem [shape: f32[2,8,128], index: 9, kind: output, shape index: {0}]
  %s10 = inlined_call_operand.vmem [shape: f32[2,8,128], index: 10, kind: output, shape index: {1}]
  %11 = xla_tuple %s9, %s10
  %s12 = sld [smem:[#allocation0]]
  $region109: #{simsiam_forward.1} parent=0
    _
  %s14 = ssub.s32 1, %s12
  %s15 = scalar_select 0, %s14, %s12
  $region1: #{simsiam_forward.1} parent=0
    #allocation2 [shape = 'u8[2097152]{0}', space=vmem, size = 0x200000, scoped, tag = 'input window, operand 1']
    #allocation3 [shape = 's32[2]{0}', space=sflag, size = 0x8, scoped, tag = 'scoped memory for simsiam_forward.1']
    #allocation4 [shape = 'u8[4096]{0}', space=vmem, size = 0x1000, scoped, tag = 'input window, operand 2']
    #allocation5 [shape = 's32[2]{0}', space=sflag, size = 0x8, scoped, tag = 'scoped memory for simsiam_forward.1']
    #allocation6 [shape = 'u8[262144]{0}', space=vmem, size = 0x40000, scoped, tag = 'input window, operand 3']
    #allocation7 [shape = 'u8[1024]{0}', space=vmem, size = 0x400, scoped, tag = 'input window, operand 4']
    #allocation8 [shape = 's32[2]{0}', space=sflag, size = 0x8, scoped, tag = 'scoped memory for simsiam_forward.1']
    #allocation9 [shape = 'u8[65536]{0}', space=vmem, size = 0x10000, scoped, tag = 'input window, operand 5']
    #allocation10 [shape = 'u8[1024]{0}', space=vmem, size = 0x400, scoped, tag = 'input window, operand 6']
    #allocation11 [shape = 's32[2]{0}', space=sflag, size = 0x8, scoped, tag = 'scoped memory for simsiam_forward.1']
    #allocation12 [shape = 'u8[65536]{0}', space=vmem, size = 0x10000, scoped, tag = 'input window, operand 7']
    #allocation13 [shape = 'u8[1024]{0}', space=vmem, size = 0x400, scoped, tag = 'input window, operand 8']
    #allocation14 [shape = 's32[2]{0}', space=sflag, size = 0x8, scoped, tag = 'scoped memory for simsiam_forward.1']
    %16 = vsyncpa [#allocation3], 0
    %s17 = scalar_lea.sflag [#allocation3], 1
    %18 = vsyncpa %s17, 0
    %19 = vsyncpa [#allocation5], 0
    %s20 = scalar_lea.sflag [#allocation5], 1
    %21 = vsyncpa %s20, 0
    %22 = vsyncpa [#allocation8], 0
    %s23 = scalar_lea.sflag [#allocation8], 1
    %24 = vsyncpa %s23, 0
    %25 = vsyncpa [#allocation11], 0
    %s26 = scalar_lea.sflag [#allocation11], 1
    %27 = vsyncpa %s26, 0
    %28 = vsyncpa [#allocation14], 0
    %s29 = scalar_lea.sflag [#allocation14], 1
    %30 = vsyncpa %s29, 0
    loop: start=0, step=1, limit=4
    $region2: #{simsiam_forward.1} parent=1 // loop_pre_header
      _
    $region3: #{simsiam_forward.1} parent=1 // loop_header
      %s32 = sphi 0, %s36
      %p33 = scmp.ge.s32.totalorder %s32, 4
      %s42 = sphi 0, %s44
      %s45 = sphi 0, %s42
      %s46 = sphi 0, %s45
      %s62 = sphi 0, %s46
      %s68 = sphi 0, %s70
      %s71 = sphi 0, %s68
      %s72 = sphi 0, %s71
      %s88 = sphi 0, %s72
      %s94 = sphi 0, %s96
      %s97 = sphi 0, %s94
      %s98 = sphi 0, %s97
      %s114 = sphi 0, %s98
      %s120 = sphi 0, %s122
      %s123 = sphi 0, %s120
      %s124 = sphi 0, %s123
      %s140 = sphi 0, %s124
      %s146 = sphi 0, %s148
      %s149 = sphi 0, %s146
      %s150 = sphi 0, %s149
      %s166 = sphi 0, %s150
      %s172 = sphi 0, %s174
      %s175 = sphi 0, %s172
      %s176 = sphi 0, %s175
      %s192 = sphi 0, %s176
      %s198 = sphi 0, %s200
      %s201 = sphi 0, %s198
      %s202 = sphi 0, %s201
      %s218 = sphi 0, %s202
      %s224 = sphi 0, %s226
      %s227 = sphi 0, %s224
      %s228 = sphi 0, %s227
      %s244 = sphi 0, %s228
      %s250 = sphi 0, %s252
      %s253 = sphi 0, %s250
      %s254 = sphi 0, %s253
      %s270 = sphi 0, %s254
      %s276 = sphi 0, %s278
      %s279 = sphi 0, %s276
      %s280 = sphi 0, %s279
      %s296 = sphi 0, %s280
      %s302 = sphi 0, %s304
      %s305 = sphi 0, %s302
      %s306 = sphi 0, %s305
      %s322 = sphi 0, %s306
    $region4: #{simsiam_forward.1} parent=1 // loop_header_branch
      %35 = sbr.rel (%p33) target = $region8
    $region5: #{simsiam_forward.1} parent=1 // loop_body
      %s37 = ssub.s32 %s32, 1
      %s38 = ssub.s32 %s32, 2
      %s39 = sadd.s32 %s32, 1
      %s40 = ssub.s32 %s32, %s39
      %p41 = scmp.eq.s32.totalorder %s40, 0
      %s43 = sadd.s32 %s42, 1
      %s44 = scalar_select %p41, %s42, %s43
      %p47 = pneg %p41
      %p48 = scmp.eq.s32.totalorder %s32, 1
      %p49 = por %p47, %p48
      %p50 = scmp.ne.s32.totalorder %s42, %s45
      %p51 = scmp.eq.s32.totalorder %s32, 0
      %p52 = por %p50, %p51
      %p53 = scmp.ne.s32.totalorder %s42, %s45
      %p54 = scmp.eq.s32.totalorder %s37, 1
      %p55 = por %p53, %p54
      %p56 = scmp.ne.s32.totalorder %s45, %s46
      %p57 = scmp.eq.s32.totalorder %s37, 0
      %p58 = por %p56, %p57
      %p59 = scmp.ne.s32.totalorder %s45, %s46
      %p60 = scmp.eq.s32.totalorder %s38, 1
      %p61 = por %p59, %p60
      %p63 = scmp.ne.s32.totalorder %s46, %s62
      %p64 = scmp.eq.s32.totalorder %s38, 0
      %p65 = por %p63, %p64
      %s66 = ssub.s32 %s32, %s39
      %p67 = scmp.eq.s32.totalorder %s66, 0
      %s69 = sadd.s32 %s68, 1
      %s70 = scalar_select %p67, %s68, %s69
      %p73 = pneg %p67
      %p74 = scmp.eq.s32.totalorder %s32, 1
      %p75 = por %p73, %p74
      %p76 = scmp.ne.s32.totalorder %s68, %s71
      %p77 = scmp.eq.s32.totalorder %s32, 0
      %p78 = por %p76, %p77
      %p79 = scmp.ne.s32.totalorder %s68, %s71
      %p80 = scmp.eq.s32.totalorder %s37, 1
      %p81 = por %p79, %p80
      %p82 = scmp.ne.s32.totalorder %s71, %s72
      %p83 = scmp.eq.s32.totalorder %s37, 0
      %p84 = por %p82, %p83
      %p85 = scmp.ne.s32.totalorder %s71, %s72
      %p86 = scmp.eq.s32.totalorder %s38, 1
      %p87 = por %p85, %p86
      %p89 = scmp.ne.s32.totalorder %s72, %s88
      %p90 = scmp.eq.s32.totalorder %s38, 0
      %p91 = por %p89, %p90
      %s92 = ssub.s32 %s32, %s39
      %p93 = scmp.eq.s32.totalorder %s92, 0
      %s95 = sadd.s32 %s94, 1
      %s96 = scalar_select %p93, %s94, %s95
      %p99 = pneg %p93
      %p100 = scmp.eq.s32.totalorder %s32, 1
      %p101 = por %p99, %p100
      %p102 = scmp.ne.s32.totalorder %s94, %s97
      %p103 = scmp.eq.s32.totalorder %s32, 0
      %p104 = por %p102, %p103
      %p105 = scmp.ne.s32.totalorder %s94, %s97
      %p106 = scmp.eq.s32.totalorder %s37, 1
      %p107 = por %p105, %p106
      %p108 = scmp.ne.s32.totalorder %s97, %s98
      %p109 = scmp.eq.s32.totalorder %s37, 0
      %p110 = por %p108, %p109
      %p111 = scmp.ne.s32.totalorder %s97, %s98
      %p112 = scmp.eq.s32.totalorder %s38, 1
      %p113 = por %p111, %p112
      %p115 = scmp.ne.s32.totalorder %s98, %s114
      %p116 = scmp.eq.s32.totalorder %s38, 0
      %p117 = por %p115, %p116
      %s118 = ssub.s32 %s32, %s39
      %p119 = scmp.eq.s32.totalorder %s118, 0
      %s121 = sadd.s32 %s120, 1
      %s122 = scalar_select %p119, %s120, %s121
      %p125 = pneg %p119
      %p126 = scmp.eq.s32.totalorder %s32, 1
      %p127 = por %p125, %p126
      %p128 = scmp.ne.s32.totalorder %s120, %s123
      %p129 = scmp.eq.s32.totalorder %s32, 0
      %p130 = por %p128, %p129
      %p131 = scmp.ne.s32.totalorder %s120, %s123
      %p132 = scmp.eq.s32.totalorder %s37, 1
      %p133 = por %p131, %p132
      %p134 = scmp.ne.s32.totalorder %s123, %s124
      %p135 = scmp.eq.s32.totalorder %s37, 0
      %p136 = por %p134, %p135
      %p137 = scmp.ne.s32.totalorder %s123, %s124
      %p138 = scmp.eq.s32.totalorder %s38, 1
      %p139 = por %p137, %p138
      %p141 = scmp.ne.s32.totalorder %s124, %s140
      %p142 = scmp.eq.s32.totalorder %s38, 0
      %p143 = por %p141, %p142
      %s144 = ssub.s32 %s32, %s39
      %p145 = scmp.eq.s32.totalorder %s144, 0
      %s147 = sadd.s32 %s146, 1
      %s148 = scalar_select %p145, %s146, %s147
      %p151 = pneg %p145
      %p152 = scmp.eq.s32.totalorder %s32, 1
      %p153 = por %p151, %p152
      %p154 = scmp.ne.s32.totalorder %s146, %s149
      %p155 = scmp.eq.s32.totalorder %s32, 0
      %p156 = por %p154, %p155
      %p157 = scmp.ne.s32.totalorder %s146, %s149
      %p158 = scmp.eq.s32.totalorder %s37, 1
      %p159 = por %p157, %p158
      %p160 = scmp.ne.s32.totalorder %s149, %s150
      %p161 = scmp.eq.s32.totalorder %s37, 0
      %p162 = por %p160, %p161
      %p163 = scmp.ne.s32.totalorder %s149, %s150
      %p164 = scmp.eq.s32.totalorder %s38, 1
      %p165 = por %p163, %p164
      %p167 = scmp.ne.s32.totalorder %s150, %s166
      %p168 = scmp.eq.s32.totalorder %s38, 0
      %p169 = por %p167, %p168
      %s170 = ssub.s32 %s32, %s39
      %p171 = scmp.eq.s32.totalorder %s170, 0
      %s173 = sadd.s32 %s172, 1
      %s174 = scalar_select %p171, %s172, %s173
      %p177 = pneg %p171
      %p178 = scmp.eq.s32.totalorder %s32, 1
      %p179 = por %p177, %p178
      %p180 = scmp.ne.s32.totalorder %s172, %s175
      %p181 = scmp.eq.s32.totalorder %s32, 0
      %p182 = por %p180, %p181
      %p183 = scmp.ne.s32.totalorder %s172, %s175
      %p184 = scmp.eq.s32.totalorder %s37, 1
      %p185 = por %p183, %p184
      %p186 = scmp.ne.s32.totalorder %s175, %s176
      %p187 = scmp.eq.s32.totalorder %s37, 0
      %p188 = por %p186, %p187
      %p189 = scmp.ne.s32.totalorder %s175, %s176
      %p190 = scmp.eq.s32.totalorder %s38, 1
      %p191 = por %p189, %p190
      %p193 = scmp.ne.s32.totalorder %s176, %s192
      %p194 = scmp.eq.s32.totalorder %s38, 0
      %p195 = por %p193, %p194
      %s196 = ssub.s32 %s32, %s39
      %p197 = scmp.eq.s32.totalorder %s196, 0
      %s199 = sadd.s32 %s198, 1
      %s200 = scalar_select %p197, %s198, %s199
      %p203 = pneg %p197
      %p204 = scmp.eq.s32.totalorder %s32, 1
      %p205 = por %p203, %p204
      %p206 = scmp.ne.s32.totalorder %s198, %s201
      %p207 = scmp.eq.s32.totalorder %s32, 0
      %p208 = por %p206, %p207
      %p209 = scmp.ne.s32.totalorder %s198, %s201
      %p210 = scmp.eq.s32.totalorder %s37, 1
      %p211 = por %p209, %p210
      %p212 = scmp.ne.s32.totalorder %s201, %s202
      %p213 = scmp.eq.s32.totalorder %s37, 0
      %p214 = por %p212, %p213
      %p215 = scmp.ne.s32.totalorder %s201, %s202
      %p216 = scmp.eq.s32.totalorder %s38, 1
      %p217 = por %p215, %p216
      %p219 = scmp.ne.s32.totalorder %s202, %s218
      %p220 = scmp.eq.s32.totalorder %s38, 0
      %p221 = por %p219, %p220
      %s222 = ssub.s32 %s32, %s39
      %p223 = scmp.eq.s32.totalorder %s222, 0
      %s225 = sadd.s32 %s224, 1
      %s226 = scalar_select %p223, %s224, %s225
      %p229 = pneg %p223
      %p230 = scmp.eq.s32.totalorder %s32, 1
      %p231 = por %p229, %p230
      %p232 = scmp.ne.s32.totalorder %s224, %s227
      %p233 = scmp.eq.s32.totalorder %s32, 0
      %p234 = por %p232, %p233
      %p235 = scmp.ne.s32.totalorder %s224, %s227
      %p236 = scmp.eq.s32.totalorder %s37, 1
      %p237 = por %p235, %p236
      %p238 = scmp.ne.s32.totalorder %s227, %s228
      %p239 = scmp.eq.s32.totalorder %s37, 0
      %p240 = por %p238, %p239
      %p241 = scmp.ne.s32.totalorder %s227, %s228
      %p242 = scmp.eq.s32.totalorder %s38, 1
      %p243 = por %p241, %p242
      %p245 = scmp.ne.s32.totalorder %s228, %s244
      %p246 = scmp.eq.s32.totalorder %s38, 0
      %p247 = por %p245, %p246
      %s248 = ssub.s32 %s32, %s39
      %p249 = scmp.eq.s32.totalorder %s248, 0
      %s251 = sadd.s32 %s250, 1
      %s252 = scalar_select %p249, %s250, %s251
      %p255 = pneg %p249
      %p256 = scmp.eq.s32.totalorder %s32, 1
      %p257 = por %p255, %p256
      %p258 = scmp.ne.s32.totalorder %s250, %s253
      %p259 = scmp.eq.s32.totalorder %s32, 0
      %p260 = por %p258, %p259
      %p261 = scmp.ne.s32.totalorder %s250, %s253
      %p262 = scmp.eq.s32.totalorder %s37, 1
      %p263 = por %p261, %p262
      %p264 = scmp.ne.s32.totalorder %s253, %s254
      %p265 = scmp.eq.s32.totalorder %s37, 0
      %p266 = por %p264, %p265
      %p267 = scmp.ne.s32.totalorder %s253, %s254
      %p268 = scmp.eq.s32.totalorder %s38, 1
      %p269 = por %p267, %p268
      %p271 = scmp.ne.s32.totalorder %s254, %s270
      %p272 = scmp.eq.s32.totalorder %s38, 0
      %p273 = por %p271, %p272
      %s274 = ssub.s32 %s32, %s39
      %p275 = scmp.eq.s32.totalorder %s274, 0
      %s277 = sadd.s32 %s276, 1
      %s278 = scalar_select %p275, %s276, %s277
      %p281 = pneg %p275
      %p282 = scmp.eq.s32.totalorder %s32, 1
      %p283 = por %p281, %p282
      %p284 = scmp.ne.s32.totalorder %s276, %s279
      %p285 = scmp.eq.s32.totalorder %s32, 0
      %p286 = por %p284, %p285
      %p287 = scmp.ne.s32.totalorder %s276, %s279
      %p288 = scmp.eq.s32.totalorder %s37, 1
      %p289 = por %p287, %p288
      %p290 = scmp.ne.s32.totalorder %s279, %s280
      %p291 = scmp.eq.s32.totalorder %s37, 0
      %p292 = por %p290, %p291
      %p293 = scmp.ne.s32.totalorder %s279, %s280
      %p294 = scmp.eq.s32.totalorder %s38, 1
      %p295 = por %p293, %p294
      %p297 = scmp.ne.s32.totalorder %s280, %s296
      %p298 = scmp.eq.s32.totalorder %s38, 0
      %p299 = por %p297, %p298
      %s300 = ssub.s32 %s32, %s39
      %p301 = scmp.eq.s32.totalorder %s300, 0
      %s303 = sadd.s32 %s302, 1
      %s304 = scalar_select %p301, %s302, %s303
      %p307 = pneg %p301
      %p308 = scmp.eq.s32.totalorder %s32, 1
      %p309 = por %p307, %p308
      %p310 = scmp.ne.s32.totalorder %s302, %s305
      %p311 = scmp.eq.s32.totalorder %s32, 0
      %p312 = por %p310, %p311
      %p313 = scmp.ne.s32.totalorder %s302, %s305
      %p314 = scmp.eq.s32.totalorder %s37, 1
      %p315 = por %p313, %p314
      %p316 = scmp.ne.s32.totalorder %s305, %s306
      %p317 = scmp.eq.s32.totalorder %s37, 0
      %p318 = por %p316, %p317
      %p319 = scmp.ne.s32.totalorder %s305, %s306
      %p320 = scmp.eq.s32.totalorder %s38, 1
      %p321 = por %p319, %p320
      %p323 = scmp.ne.s32.totalorder %s306, %s322
      %p324 = scmp.eq.s32.totalorder %s38, 0
      %p325 = por %p323, %p324
      %p326 = scmp.le.s32.totalorder 1, %s32
      %p327 = scmp.lt.s32.totalorder %s32, 3
      %p328 = pnand %p326, %p327
      %p329 = pneg %p328
      // Predicated region
      $region9: #{simsiam_forward.1} parent=5 // pred_check
        _
      $region10: #{simsiam_forward.1} parent=5 // pred_check_branch
        %331 = sbr.rel (%p328) target = $region12
      $region11: #{simsiam_forward.1} parent=5 // pred_region
        %s332 = ssub.s32 %s32, 1
      $region12: #{simsiam_forward.1} parent=5 // pred_fallthru
        _
      %p333 = scmp.lt.s32.totalorder %s32, 2
      // Predicated region
      $region13: #{simsiam_forward.1} parent=5 // pred_check
        %p334 = pneg %p333
      $region14: #{simsiam_forward.1} parent=5 // pred_check_branch
        %336 = sbr.rel (%p334) target = $region16
      $region15: #{simsiam_forward.1} parent=5 // pred_region
        // Predicated region
        $region17: #{simsiam_forward.1} parent=15 // pred_check
          %p337 = pneg %p52
        $region18: #{simsiam_forward.1} parent=15 // pred_check_branch
          %339 = sbr.rel (%p337) target = $region20
        $region19: #{simsiam_forward.1} parent=15 // pred_region
          %p340 = scmp.lt.s32.totalorder %s32, 1
          %s341 = scalar_select %p340, %s32, 1
          %s342 = smul.addr %s341, 8
          %s343 = smul.addr %s342, 8
          %s344 = scalar_lea.vmem %s0, %s343
        $region20: #{simsiam_forward.1} parent=15 // pred_fallthru
          _
        // Predicated region
        $region21: #{simsiam_forward.1} parent=15 // pred_check
          %p345 = pneg %p78
        $region22: #{simsiam_forward.1} parent=15 // pred_check_branch
          %347 = sbr.rel (%p345) target = $region24
        $region23: #{simsiam_forward.1} parent=15 // pred_region
          %s348 = sand.u32 %s68, 1
          %s349 = scalar_lea.sflag [#allocation3], %s348
          %s350 = sand.u32 %s68, 1
          %s351 = smul.addr %s350, 2048
          %s352 = scalar_lea.vmem [#allocation2], %s351
          %s354 = ssub.s32 32768, 32768
          %355 = vsyncadd %s349, %s354
          %s356 = smul.addr %s32, 512
          %s357 = smul.addr %s356, 64
          %s358 = scalar_lea.hbm %s1, %s357
          %s359 = sshll.u32 %s352, 4
          %s360 = int_to_ptr.vmem [resolvable:$true] %s359
          %365 = dma.hbm_to_vmem [thread:$0]  %s358, 32768, %s360, %s349, 256, 256, 16
        $region24: #{simsiam_forward.1} parent=15 // pred_fallthru
          _
        // Predicated region
        $region25: #{simsiam_forward.1} parent=15 // pred_check
          %p366 = pneg %p104
        $region26: #{simsiam_forward.1} parent=15 // pred_check_branch
          %368 = sbr.rel (%p366) target = $region28
        $region27: #{simsiam_forward.1} parent=15 // pred_region
          %s369 = sand.u32 %s32, 1
          %s370 = scalar_lea.sflag [#allocation5], %s369
          %s371 = sand.u32 %s94, 1
          %s372 = smul.addr %s371, 4
          %s373 = scalar_lea.vmem [#allocation4], %s372
          %s375 = ssub.s32 64, 64
          %376 = vsyncadd %s370, %s375
          %s377 = smul.addr %s32, 4
          %s378 = smul.addr %s377, 16
          %s379 = scalar_lea.hbm %s2, %s378
          %s381 = sshll.u32 %s373, 4
          %s382 = int_to_ptr.vmem [resolvable:$true] %s381
          %384 = dma.hbm_to_vmem [thread:$0]  %s379, 64, %s382, %s370
        $region28: #{simsiam_forward.1} parent=15 // pred_fallthru
          _
        // Predicated region
        $region29: #{simsiam_forward.1} parent=15 // pred_check
          %p385 = pneg %p130
        $region30: #{simsiam_forward.1} parent=15 // pred_check_branch
          %387 = sbr.rel (%p385) target = $region32
        $region31: #{simsiam_forward.1} parent=15 // pred_region
          %s388 = sand.u32 %s32, 1
          %s389 = scalar_lea.sflag [#allocation5], %s388
          %s390 = sand.u32 %s120, 1
          %s391 = smul.addr %s390, 256
          %s392 = scalar_lea.vmem [#allocation6], %s391
          %s394 = ssub.s32 4096, 4096
          %395 = vsyncadd %s389, %s394
          %s396 = smul.addr %s32, 64
          %s397 = smul.addr %s396, 64
          %s398 = scalar_lea.hbm %s3, %s397
          %s399 = sshll.u32 %s392, 4
          %s400 = int_to_ptr.vmem [resolvable:$true] %s399
          %405 = dma.hbm_to_vmem [thread:$0]  %s398, 4096, %s400, %s389, 64, 64, 4
        $region32: #{simsiam_forward.1} parent=15 // pred_fallthru
          _
        // Predicated region
        $region33: #{simsiam_forward.1} parent=15 // pred_check
          %p406 = pneg %p156
        $region34: #{simsiam_forward.1} parent=15 // pred_check_branch
          %408 = sbr.rel (%p406) target = $region36
        $region35: #{simsiam_forward.1} parent=15 // pred_region
          %s409 = sand.u32 %s32, 1
          %s410 = scalar_lea.sflag [#allocation8], %s409
          %s411 = sand.u32 %s146, 1
          %s412 = scalar_lea.vmem [#allocation7], %s411
          %s414 = ssub.s32 16, 16
          %415 = vsyncadd %s410, %s414
          %s416 = smul.addr %s32, 16
          %s417 = scalar_lea.hbm %s4, %s416
          %s419 = sshll.u32 %s412, 4
          %s420 = int_to_ptr.vmem [resolvable:$true] %s419
          %422 = dma.hbm_to_vmem [thread:$0]  %s417, 16, %s420, %s410
        $region36: #{simsiam_forward.1} parent=15 // pred_fallthru
          _
        // Predicated region
        $region37: #{simsiam_forward.1} parent=15 // pred_check
          %p423 = pneg %p182
        $region38: #{simsiam_forward.1} parent=15 // pred_check_branch
          %425 = sbr.rel (%p423) target = $region40
        $region39: #{simsiam_forward.1} parent=15 // pred_region
          %s426 = sand.u32 %s32, 1
          %s427 = scalar_lea.sflag [#allocation8], %s426
          %s428 = sand.u32 %s172, 1
          %s429 = smul.addr %s428, 64
          %s430 = scalar_lea.vmem [#allocation9], %s429
          %s432 = ssub.s32 1024, 1024
          %433 = vsyncadd %s427, %s432
          %s434 = smul.addr %s32, 16
          %s435 = smul.addr %s434, 64
          %s436 = scalar_lea.hbm %s5, %s435
          %s437 = sshll.u32 %s430, 4
          %s438 = int_to_ptr.vmem [resolvable:$true] %s437
          %443 = dma.hbm_to_vmem [thread:$0]  %s436, 1024, %s438, %s427, 64, 64, 4
        $region40: #{simsiam_forward.1} parent=15 // pred_fallthru
          _
        // Predicated region
        $region41: #{simsiam_forward.1} parent=15 // pred_check
          %p444 = pneg %p208
        $region42: #{simsiam_forward.1} parent=15 // pred_check_branch
          %446 = sbr.rel (%p444) target = $region44
        $region43: #{simsiam_forward.1} parent=15 // pred_region
          %s447 = sand.u32 %s32, 1
          %s448 = scalar_lea.sflag [#allocation11], %s447
          %s449 = sand.u32 %s198, 1
          %s450 = scalar_lea.vmem [#allocation10], %s449
          %s452 = ssub.s32 16, 16
          %453 = vsyncadd %s448, %s452
          %s454 = smul.addr %s32, 16
          %s455 = scalar_lea.hbm %s6, %s454
          %s457 = sshll.u32 %s450, 4
          %s458 = int_to_ptr.vmem [resolvable:$true] %s457
          %460 = dma.hbm_to_vmem [thread:$0]  %s455, 16, %s458, %s448
        $region44: #{simsiam_forward.1} parent=15 // pred_fallthru
          _
        // Predicated region
        $region45: #{simsiam_forward.1} parent=15 // pred_check
          %p461 = pneg %p234
        $region46: #{simsiam_forward.1} parent=15 // pred_check_branch
          %463 = sbr.rel (%p461) target = $region48
        $region47: #{simsiam_forward.1} parent=15 // pred_region
          %s464 = sand.u32 %s32, 1
          %s465 = scalar_lea.sflag [#allocation11], %s464
          %s466 = sand.u32 %s224, 1
          %s467 = smul.addr %s466, 64
          %s468 = scalar_lea.vmem [#allocation12], %s467
          %s470 = ssub.s32 1024, 1024
          %471 = vsyncadd %s465, %s470
          %s472 = smul.addr %s32, 16
          %s473 = smul.addr %s472, 64
          %s474 = scalar_lea.hbm %s7, %s473
          %s475 = sshll.u32 %s468, 4
          %s476 = int_to_ptr.vmem [resolvable:$true] %s475
          %481 = dma.hbm_to_vmem [thread:$0]  %s474, 1024, %s476, %s465, 64, 64, 4
        $region48: #{simsiam_forward.1} parent=15 // pred_fallthru
          _
        // Predicated region
        $region49: #{simsiam_forward.1} parent=15 // pred_check
          %p482 = pneg %p260
        $region50: #{simsiam_forward.1} parent=15 // pred_check_branch
          %484 = sbr.rel (%p482) target = $region52
        $region51: #{simsiam_forward.1} parent=15 // pred_region
          %s485 = sand.u32 %s250, 1
          %s486 = scalar_lea.sflag [#allocation14], %s485
          %s487 = sand.u32 %s250, 1
          %s488 = scalar_lea.vmem [#allocation13], %s487
          %s490 = ssub.s32 16, 16
          %491 = vsyncadd %s486, %s490
          %s492 = smul.addr %s32, 16
          %s493 = scalar_lea.hbm %s8, %s492
          %s495 = sshll.u32 %s488, 4
          %s496 = int_to_ptr.vmem [resolvable:$true] %s495
          %498 = dma.hbm_to_vmem [thread:$0]  %s493, 16, %s496, %s486
        $region52: #{simsiam_forward.1} parent=15 // pred_fallthru
          _
      $region16: #{simsiam_forward.1} parent=5 // pred_fallthru
        _
      %p499 = scmp.le.s32.totalorder 1, %s32
      %p500 = scmp.lt.s32.totalorder %s32, 3
      %p501 = pnand %p499, %p500
      %p502 = pneg %p501
      // Predicated region
      $region53: #{simsiam_forward.1} parent=5 // pred_check
        _
      $region54: #{simsiam_forward.1} parent=5 // pred_check_branch
        %504 = sbr.rel (%p501) target = $region56
      $region55: #{simsiam_forward.1} parent=5 // pred_region
        %s505 = ssub.s32 %s32, 1
        %s506 = sand.u32 %s71, 1
        %s507 = scalar_lea.sflag [#allocation3], %s506
        %s508 = sand.u32 %s71, 1
        %s509 = smul.addr %s508, 2048
        %s510 = scalar_lea.vmem [#allocation2], %s509
        // Predicated region
        $region57: #{simsiam_forward.1} parent=55 // pred_check
          %p511 = pneg %p84
        $region58: #{simsiam_forward.1} parent=55 // pred_check_branch
          %513 = sbr.rel (%p511) target = $region60
        $region59: #{simsiam_forward.1} parent=55 // pred_region
          %514 = dma.done %s507, 32768
        $region60: #{simsiam_forward.1} parent=55 // pred_fallthru
          _
        %s515 = sand.u32 %s37, 1
        %s516 = scalar_lea.sflag [#allocation5], %s515
        %s517 = sand.u32 %s97, 1
        %s518 = smul.addr %s517, 4
        %s519 = scalar_lea.vmem [#allocation4], %s518
        // Predicated region
        $region61: #{simsiam_forward.1} parent=55 // pred_check
          %p520 = pneg %p110
        $region62: #{simsiam_forward.1} parent=55 // pred_check_branch
          %522 = sbr.rel (%p520) target = $region64
        $region63: #{simsiam_forward.1} parent=55 // pred_region
          %523 = dma.done %s516, 64
        $region64: #{simsiam_forward.1} parent=55 // pred_fallthru
          _
        %s524 = sand.u32 %s37, 1
        %s525 = scalar_lea.sflag [#allocation5], %s524
        %s526 = sand.u32 %s123, 1
        %s527 = smul.addr %s526, 256
        %s528 = scalar_lea.vmem [#allocation6], %s527
        // Predicated region
        $region65: #{simsiam_forward.1} parent=55 // pred_check
          %p529 = pneg %p136
        $region66: #{simsiam_forward.1} parent=55 // pred_check_branch
          %531 = sbr.rel (%p529) target = $region68
        $region67: #{simsiam_forward.1} parent=55 // pred_region
          %532 = dma.done %s525, 4096
        $region68: #{simsiam_forward.1} parent=55 // pred_fallthru
          _
        %s533 = sand.u32 %s37, 1
        %s534 = scalar_lea.sflag [#allocation8], %s533
        %s535 = sand.u32 %s149, 1
        %s536 = scalar_lea.vmem [#allocation7], %s535
        // Predicated region
        $region69: #{simsiam_forward.1} parent=55 // pred_check
          %p537 = pneg %p162
        $region70: #{simsiam_forward.1} parent=55 // pred_check_branch
          %539 = sbr.rel (%p537) target = $region72
        $region71: #{simsiam_forward.1} parent=55 // pred_region
          %540 = dma.done %s534, 16
        $region72: #{simsiam_forward.1} parent=55 // pred_fallthru
          _
        %s541 = sand.u32 %s37, 1
        %s542 = scalar_lea.sflag [#allocation8], %s541
        %s543 = sand.u32 %s175, 1
        %s544 = smul.addr %s543, 64
        %s545 = scalar_lea.vmem [#allocation9], %s544
        // Predicated region
        $region73: #{simsiam_forward.1} parent=55 // pred_check
          %p546 = pneg %p188
        $region74: #{simsiam_forward.1} parent=55 // pred_check_branch
          %548 = sbr.rel (%p546) target = $region76
        $region75: #{simsiam_forward.1} parent=55 // pred_region
          %549 = dma.done %s542, 1024
        $region76: #{simsiam_forward.1} parent=55 // pred_fallthru
          _
        %s550 = sand.u32 %s37, 1
        %s551 = scalar_lea.sflag [#allocation11], %s550
        %s552 = sand.u32 %s201, 1
        %s553 = scalar_lea.vmem [#allocation10], %s552
        // Predicated region
        $region77: #{simsiam_forward.1} parent=55 // pred_check
          %p554 = pneg %p214
        $region78: #{simsiam_forward.1} parent=55 // pred_check_branch
          %556 = sbr.rel (%p554) target = $region80
        $region79: #{simsiam_forward.1} parent=55 // pred_region
          %557 = dma.done %s551, 16
        $region80: #{simsiam_forward.1} parent=55 // pred_fallthru
          _
        %s558 = sand.u32 %s37, 1
        %s559 = scalar_lea.sflag [#allocation11], %s558
        %s560 = sand.u32 %s227, 1
        %s561 = smul.addr %s560, 64
        %s562 = scalar_lea.vmem [#allocation12], %s561
        // Predicated region
        $region81: #{simsiam_forward.1} parent=55 // pred_check
          %p563 = pneg %p240
        $region82: #{simsiam_forward.1} parent=55 // pred_check_branch
          %565 = sbr.rel (%p563) target = $region84
        $region83: #{simsiam_forward.1} parent=55 // pred_region
          %566 = dma.done %s559, 1024
        $region84: #{simsiam_forward.1} parent=55 // pred_fallthru
          _
        %s567 = sand.u32 %s253, 1
        %s568 = scalar_lea.sflag [#allocation14], %s567
        %s569 = sand.u32 %s253, 1
        %s570 = scalar_lea.vmem [#allocation13], %s569
        // Predicated region
        $region85: #{simsiam_forward.1} parent=55 // pred_check
          %p571 = pneg %p266
        $region86: #{simsiam_forward.1} parent=55 // pred_check_branch
          %573 = sbr.rel (%p571) target = $region88
        $region87: #{simsiam_forward.1} parent=55 // pred_region
          %574 = dma.done %s568, 16
        $region88: #{simsiam_forward.1} parent=55 // pred_fallthru
          _
        %p575 = scmp.lt.s32.totalorder %s37, 1
        %s576 = scalar_select %p575, %s37, 1
        %s577 = smul.addr %s576, 8
        %s578 = smul.addr %s577, 8
        %s579 = scalar_lea.vmem %s0, %s578
        %p580 = pneg %p58
        %p581 = pneg %p55
        %s582 = sand.u32 %s71, 1
        %s583 = scalar_lea.sflag [#allocation3], %s582
        %s584 = sand.u32 %s71, 1
        %s585 = smul.addr %s584, 2048
        %s586 = scalar_lea.vmem [#allocation2], %s585
        %p587 = pneg %p84
        %p588 = pneg %p81
        %s589 = sand.u32 %s37, 1
        %s590 = scalar_lea.sflag [#allocation5], %s589
        %s591 = sand.u32 %s97, 1
        %s592 = smul.addr %s591, 4
        %s593 = scalar_lea.vmem [#allocation4], %s592
        %p594 = pneg %p110
        %p595 = pneg %p107
        %s596 = sand.u32 %s37, 1
        %s597 = scalar_lea.sflag [#allocation5], %s596
        %s598 = sand.u32 %s123, 1
        %s599 = smul.addr %s598, 256
        %s600 = scalar_lea.vmem [#allocation6], %s599
        %p601 = pneg %p136
        %p602 = pneg %p133
        %s603 = sand.u32 %s37, 1
        %s604 = scalar_lea.sflag [#allocation8], %s603
        %s605 = sand.u32 %s149, 1
        %s606 = scalar_lea.vmem [#allocation7], %s605
        %p607 = pneg %p162
        %p608 = pneg %p159
        %s609 = sand.u32 %s37, 1
        %s610 = scalar_lea.sflag [#allocation8], %s609
        %s611 = sand.u32 %s175, 1
        %s612 = smul.addr %s611, 64
        %s613 = scalar_lea.vmem [#allocation9], %s612
        %p614 = pneg %p188
        %p615 = pneg %p185
        %s616 = sand.u32 %s37, 1
        %s617 = scalar_lea.sflag [#allocation11], %s616
        %s618 = sand.u32 %s201, 1
        %s619 = scalar_lea.vmem [#allocation10], %s618
        %p620 = pneg %p214
        %p621 = pneg %p211
        %s622 = sand.u32 %s37, 1
        %s623 = scalar_lea.sflag [#allocation11], %s622
        %s624 = sand.u32 %s227, 1
        %s625 = smul.addr %s624, 64
        %s626 = scalar_lea.vmem [#allocation12], %s625
        %p627 = pneg %p240
        %p628 = pneg %p237
        %s629 = sand.u32 %s253, 1
        %s630 = scalar_lea.sflag [#allocation14], %s629
        %s631 = sand.u32 %s253, 1
        %s632 = scalar_lea.vmem [#allocation13], %s631
        %p633 = pneg %p266
        %p634 = pneg %p263
        %p635 = pneg %p292
        %p636 = pneg %p289
        %p637 = scmp.lt.s32.totalorder %s37, 1
        %s638 = scalar_select %p637, %s37, 1
        %s639 = smul.addr %s638, 8
        %s640 = scalar_lea.vmem %s9, %s639
        %p641 = pneg %p318
        %p642 = pneg %p315
        %p643 = scmp.lt.s32.totalorder %s37, 1
        %s644 = scalar_select %p643, %s37, 1
        %s645 = smul.addr %s644, 8
        %s646 = scalar_lea.vmem %s10, %s645
        %p647 = scmp.lt.s32.totalorder %s37, 1
        %s648 = scalar_select %p647, %s37, 1
        %s649 = smul.addr %s648, 8
        %s650 = smul.addr %s649, 8
        %s651 = scalar_lea.vmem %s0, %s650
        %p652 = scmp.lt.s32.totalorder %s37, 1
        %s653 = scalar_select %p652, %s37, 1
        %s654 = smul.addr %s653, 8
        %s655 = scalar_lea.vmem %s9, %s654
        %p656 = scmp.lt.s32.totalorder %s37, 1
        %s657 = scalar_select %p656, %s37, 1
        %s658 = smul.addr %s657, 8
        %s659 = scalar_lea.vmem %s10, %s658
        %v660 = vld [vmem:[%s651] sm:$0xff]
        %v661 = vld [vmem:[%s651 + $0x8] sm:$0xff]
        %v662 = vld [vmem:[%s651 + $0x10] sm:$0xff]
        %v663 = vld [vmem:[%s651 + $0x18] sm:$0xff]
        %v664 = vld [vmem:[%s651 + $0x20] sm:$0xff]
        %v665 = vld [vmem:[%s651 + $0x28] sm:$0xff]
        %v666 = vld [vmem:[%s651 + $0x30] sm:$0xff]
        %v667 = vld [vmem:[%s651 + $0x38] sm:$0xff]
        %v668 = vld [vmem:[%s510] sm:$0xff]
        %v669 = vld [vmem:[%s510 + $0x8] sm:$0xff]
        %v670 = vld [vmem:[%s510 + $0x10] sm:$0xff]
        %v671 = vld [vmem:[%s510 + $0x18] sm:$0xff]
        %v672 = vld [vmem:[%s510 + $0x20] sm:$0xff]
        %v673 = vld [vmem:[%s510 + $0x28] sm:$0xff]
        %v674 = vld [vmem:[%s510 + $0x30] sm:$0xff]
        %v675 = vld [vmem:[%s510 + $0x38] sm:$0xff]
        %v676 = vld [vmem:[%s510 + $0x40] sm:$0xff]
        %v677 = vld [vmem:[%s510 + $0x48] sm:$0xff]
        %v678 = vld [vmem:[%s510 + $0x50] sm:$0xff]
        %v679 = vld [vmem:[%s510 + $0x58] sm:$0xff]
        %v680 = vld [vmem:[%s510 + $0x60] sm:$0xff]
        %v681 = vld [vmem:[%s510 + $0x68] sm:$0xff]
        %v682 = vld [vmem:[%s510 + $0x70] sm:$0xff]
        %v683 = vld [vmem:[%s510 + $0x78] sm:$0xff]
        %v684 = vld [vmem:[%s510 + $0x80] sm:$0xff]
        %v685 = vld [vmem:[%s510 + $0x88] sm:$0xff]
        %v686 = vld [vmem:[%s510 + $0x90] sm:$0xff]
        %v687 = vld [vmem:[%s510 + $0x98] sm:$0xff]
        %v688 = vld [vmem:[%s510 + $0xa0] sm:$0xff]
        %v689 = vld [vmem:[%s510 + $0xa8] sm:$0xff]
        %v690 = vld [vmem:[%s510 + $0xb0] sm:$0xff]
        %v691 = vld [vmem:[%s510 + $0xb8] sm:$0xff]
        %v692 = vld [vmem:[%s510 + $0xc0] sm:$0xff]
        %v693 = vld [vmem:[%s510 + $0xc8] sm:$0xff]
        %v694 = vld [vmem:[%s510 + $0xd0] sm:$0xff]
        %v695 = vld [vmem:[%s510 + $0xd8] sm:$0xff]
        %v696 = vld [vmem:[%s510 + $0xe0] sm:$0xff]
        %v697 = vld [vmem:[%s510 + $0xe8] sm:$0xff]
        %v698 = vld [vmem:[%s510 + $0xf0] sm:$0xff]
        %v699 = vld [vmem:[%s510 + $0xf8] sm:$0xff]
        %v700 = vld [vmem:[%s510 + $0x100] sm:$0xff]
        %v701 = vld [vmem:[%s510 + $0x108] sm:$0xff]
        %v702 = vld [vmem:[%s510 + $0x110] sm:$0xff]
        %v703 = vld [vmem:[%s510 + $0x118] sm:$0xff]
        %v704 = vld [vmem:[%s510 + $0x120] sm:$0xff]
        %v705 = vld [vmem:[%s510 + $0x128] sm:$0xff]
        %v706 = vld [vmem:[%s510 + $0x130] sm:$0xff]
        %v707 = vld [vmem:[%s510 + $0x138] sm:$0xff]
        %v708 = vld [vmem:[%s510 + $0x140] sm:$0xff]
        %v709 = vld [vmem:[%s510 + $0x148] sm:$0xff]
        %v710 = vld [vmem:[%s510 + $0x150] sm:$0xff]
        %v711 = vld [vmem:[%s510 + $0x158] sm:$0xff]
        %v712 = vld [vmem:[%s510 + $0x160] sm:$0xff]
        %v713 = vld [vmem:[%s510 + $0x168] sm:$0xff]
        %v714 = vld [vmem:[%s510 + $0x170] sm:$0xff]
        %v715 = vld [vmem:[%s510 + $0x178] sm:$0xff]
        %v716 = vld [vmem:[%s510 + $0x180] sm:$0xff]
        %v717 = vld [vmem:[%s510 + $0x188] sm:$0xff]
        %v718 = vld [vmem:[%s510 + $0x190] sm:$0xff]
        %v719 = vld [vmem:[%s510 + $0x198] sm:$0xff]
        %v720 = vld [vmem:[%s510 + $0x1a0] sm:$0xff]
        %v721 = vld [vmem:[%s510 + $0x1a8] sm:$0xff]
        %v722 = vld [vmem:[%s510 + $0x1b0] sm:$0xff]
        %v723 = vld [vmem:[%s510 + $0x1b8] sm:$0xff]
        %v724 = vld [vmem:[%s510 + $0x1c0] sm:$0xff]
        %v725 = vld [vmem:[%s510 + $0x1c8] sm:$0xff]
        %v726 = vld [vmem:[%s510 + $0x1d0] sm:$0xff]
        %v727 = vld [vmem:[%s510 + $0x1d8] sm:$0xff]
        %v728 = vld [vmem:[%s510 + $0x1e0] sm:$0xff]
        %v729 = vld [vmem:[%s510 + $0x1e8] sm:$0xff]
        %v730 = vld [vmem:[%s510 + $0x1f0] sm:$0xff]
        %v731 = vld [vmem:[%s510 + $0x1f8] sm:$0xff]
        %v732 = vld [vmem:[%s510 + $0x200] sm:$0xff]
        %v733 = vld [vmem:[%s510 + $0x208] sm:$0xff]
        %v734 = vld [vmem:[%s510 + $0x210] sm:$0xff]
        %v735 = vld [vmem:[%s510 + $0x218] sm:$0xff]
        %v736 = vld [vmem:[%s510 + $0x220] sm:$0xff]
        %v737 = vld [vmem:[%s510 + $0x228] sm:$0xff]
        %v738 = vld [vmem:[%s510 + $0x230] sm:$0xff]
        %v739 = vld [vmem:[%s510 + $0x238] sm:$0xff]
        %v740 = vld [vmem:[%s510 + $0x240] sm:$0xff]
        %v741 = vld [vmem:[%s510 + $0x248] sm:$0xff]
        %v742 = vld [vmem:[%s510 + $0x250] sm:$0xff]
        %v743 = vld [vmem:[%s510 + $0x258] sm:$0xff]
        %v744 = vld [vmem:[%s510 + $0x260] sm:$0xff]
        %v745 = vld [vmem:[%s510 + $0x268] sm:$0xff]
        %v746 = vld [vmem:[%s510 + $0x270] sm:$0xff]
        %v747 = vld [vmem:[%s510 + $0x278] sm:$0xff]
        %v748 = vld [vmem:[%s510 + $0x280] sm:$0xff]
        %v749 = vld [vmem:[%s510 + $0x288] sm:$0xff]
        %v750 = vld [vmem:[%s510 + $0x290] sm:$0xff]
        %v751 = vld [vmem:[%s510 + $0x298] sm:$0xff]
        %v752 = vld [vmem:[%s510 + $0x2a0] sm:$0xff]
        %v753 = vld [vmem:[%s510 + $0x2a8] sm:$0xff]
        %v754 = vld [vmem:[%s510 + $0x2b0] sm:$0xff]
        %v755 = vld [vmem:[%s510 + $0x2b8] sm:$0xff]
        %v756 = vld [vmem:[%s510 + $0x2c0] sm:$0xff]
        %v757 = vld [vmem:[%s510 + $0x2c8] sm:$0xff]
        %v758 = vld [vmem:[%s510 + $0x2d0] sm:$0xff]
        %v759 = vld [vmem:[%s510 + $0x2d8] sm:$0xff]
        %v760 = vld [vmem:[%s510 + $0x2e0] sm:$0xff]
        %v761 = vld [vmem:[%s510 + $0x2e8] sm:$0xff]
        %v762 = vld [vmem:[%s510 + $0x2f0] sm:$0xff]
        %v763 = vld [vmem:[%s510 + $0x2f8] sm:$0xff]
        %v764 = vld [vmem:[%s510 + $0x300] sm:$0xff]
        %v765 = vld [vmem:[%s510 + $0x308] sm:$0xff]
        %v766 = vld [vmem:[%s510 + $0x310] sm:$0xff]
        %v767 = vld [vmem:[%s510 + $0x318] sm:$0xff]
        %v768 = vld [vmem:[%s510 + $0x320] sm:$0xff]
        %v769 = vld [vmem:[%s510 + $0x328] sm:$0xff]
        %v770 = vld [vmem:[%s510 + $0x330] sm:$0xff]
        %v771 = vld [vmem:[%s510 + $0x338] sm:$0xff]
        %v772 = vld [vmem:[%s510 + $0x340] sm:$0xff]
        %v773 = vld [vmem:[%s510 + $0x348] sm:$0xff]
        %v774 = vld [vmem:[%s510 + $0x350] sm:$0xff]
        %v775 = vld [vmem:[%s510 + $0x358] sm:$0xff]
        %v776 = vld [vmem:[%s510 + $0x360] sm:$0xff]
        %v777 = vld [vmem:[%s510 + $0x368] sm:$0xff]
        %v778 = vld [vmem:[%s510 + $0x370] sm:$0xff]
        %v779 = vld [vmem:[%s510 + $0x378] sm:$0xff]
        %v780 = vld [vmem:[%s510 + $0x380] sm:$0xff]
        %v781 = vld [vmem:[%s510 + $0x388] sm:$0xff]
        %v782 = vld [vmem:[%s510 + $0x390] sm:$0xff]
        %v783 = vld [vmem:[%s510 + $0x398] sm:$0xff]
        %v784 = vld [vmem:[%s510 + $0x3a0] sm:$0xff]
        %v785 = vld [vmem:[%s510 + $0x3a8] sm:$0xff]
        %v786 = vld [vmem:[%s510 + $0x3b0] sm:$0xff]
        %v787 = vld [vmem:[%s510 + $0x3b8] sm:$0xff]
        %v788 = vld [vmem:[%s510 + $0x3c0] sm:$0xff]
        %v789 = vld [vmem:[%s510 + $0x3c8] sm:$0xff]
        %v790 = vld [vmem:[%s510 + $0x3d0] sm:$0xff]
        %v791 = vld [vmem:[%s510 + $0x3d8] sm:$0xff]
        %v792 = vld [vmem:[%s510 + $0x3e0] sm:$0xff]
        %v793 = vld [vmem:[%s510 + $0x3e8] sm:$0xff]
        %v794 = vld [vmem:[%s510 + $0x3f0] sm:$0xff]
        %v795 = vld [vmem:[%s510 + $0x3f8] sm:$0xff]
        %v796 = vld [vmem:[%s510 + $0x400] sm:$0xff]
        %v797 = vld [vmem:[%s510 + $0x408] sm:$0xff]
        %v798 = vld [vmem:[%s510 + $0x410] sm:$0xff]
        %v799 = vld [vmem:[%s510 + $0x418] sm:$0xff]
        %v800 = vld [vmem:[%s510 + $0x420] sm:$0xff]
        %v801 = vld [vmem:[%s510 + $0x428] sm:$0xff]
        %v802 = vld [vmem:[%s510 + $0x430] sm:$0xff]
        %v803 = vld [vmem:[%s510 + $0x438] sm:$0xff]
        %v804 = vld [vmem:[%s510 + $0x440] sm:$0xff]
        %v805 = vld [vmem:[%s510 + $0x448] sm:$0xff]
        %v806 = vld [vmem:[%s510 + $0x450] sm:$0xff]
        %v807 = vld [vmem:[%s510 + $0x458] sm:$0xff]
        %v808 = vld [vmem:[%s510 + $0x460] sm:$0xff]
        %v809 = vld [vmem:[%s510 + $0x468] sm:$0xff]
        %v810 = vld [vmem:[%s510 + $0x470] sm:$0xff]
        %v811 = vld [vmem:[%s510 + $0x478] sm:$0xff]
        %v812 = vld [vmem:[%s510 + $0x480] sm:$0xff]
        %v813 = vld [vmem:[%s510 + $0x488] sm:$0xff]
        %v814 = vld [vmem:[%s510 + $0x490] sm:$0xff]
        %v815 = vld [vmem:[%s510 + $0x498] sm:$0xff]
        %v816 = vld [vmem:[%s510 + $0x4a0] sm:$0xff]
        %v817 = vld [vmem:[%s510 + $0x4a8] sm:$0xff]
        %v818 = vld [vmem:[%s510 + $0x4b0] sm:$0xff]
        %v819 = vld [vmem:[%s510 + $0x4b8] sm:$0xff]
        %v820 = vld [vmem:[%s510 + $0x4c0] sm:$0xff]
        %v821 = vld [vmem:[%s510 + $0x4c8] sm:$0xff]
        %v822 = vld [vmem:[%s510 + $0x4d0] sm:$0xff]
        %v823 = vld [vmem:[%s510 + $0x4d8] sm:$0xff]
        %v824 = vld [vmem:[%s510 + $0x4e0] sm:$0xff]
        %v825 = vld [vmem:[%s510 + $0x4e8] sm:$0xff]
        %v826 = vld [vmem:[%s510 + $0x4f0] sm:$0xff]
        %v827 = vld [vmem:[%s510 + $0x4f8] sm:$0xff]
        %v828 = vld [vmem:[%s510 + $0x500] sm:$0xff]
        %v829 = vld [vmem:[%s510 + $0x508] sm:$0xff]
        %v830 = vld [vmem:[%s510 + $0x510] sm:$0xff]
        %v831 = vld [vmem:[%s510 + $0x518] sm:$0xff]
        %v832 = vld [vmem:[%s510 + $0x520] sm:$0xff]
        %v833 = vld [vmem:[%s510 + $0x528] sm:$0xff]
        %v834 = vld [vmem:[%s510 + $0x530] sm:$0xff]
        %v835 = vld [vmem:[%s510 + $0x538] sm:$0xff]
        %v836 = vld [vmem:[%s510 + $0x540] sm:$0xff]
        %v837 = vld [vmem:[%s510 + $0x548] sm:$0xff]
        %v838 = vld [vmem:[%s510 + $0x550] sm:$0xff]
        %v839 = vld [vmem:[%s510 + $0x558] sm:$0xff]
        %v840 = vld [vmem:[%s510 + $0x560] sm:$0xff]
        %v841 = vld [vmem:[%s510 + $0x568] sm:$0xff]
        %v842 = vld [vmem:[%s510 + $0x570] sm:$0xff]
        %v843 = vld [vmem:[%s510 + $0x578] sm:$0xff]
        %v844 = vld [vmem:[%s510 + $0x580] sm:$0xff]
        %v845 = vld [vmem:[%s510 + $0x588] sm:$0xff]
        %v846 = vld [vmem:[%s510 + $0x590] sm:$0xff]
        %v847 = vld [vmem:[%s510 + $0x598] sm:$0xff]
        %v848 = vld [vmem:[%s510 + $0x5a0] sm:$0xff]
        %v849 = vld [vmem:[%s510 + $0x5a8] sm:$0xff]
        %v850 = vld [vmem:[%s510 + $0x5b0] sm:$0xff]
        %v851 = vld [vmem:[%s510 + $0x5b8] sm:$0xff]
        %v852 = vld [vmem:[%s510 + $0x5c0] sm:$0xff]
        %v853 = vld [vmem:[%s510 + $0x5c8] sm:$0xff]
        %v854 = vld [vmem:[%s510 + $0x5d0] sm:$0xff]
        %v855 = vld [vmem:[%s510 + $0x5d8] sm:$0xff]
        %v856 = vld [vmem:[%s510 + $0x5e0] sm:$0xff]
        %v857 = vld [vmem:[%s510 + $0x5e8] sm:$0xff]
        %v858 = vld [vmem:[%s510 + $0x5f0] sm:$0xff]
        %v859 = vld [vmem:[%s510 + $0x5f8] sm:$0xff]
        %v860 = vld [vmem:[%s510 + $0x600] sm:$0xff]
        %v861 = vld [vmem:[%s510 + $0x608] sm:$0xff]
        %v862 = vld [vmem:[%s510 + $0x610] sm:$0xff]
        %v863 = vld [vmem:[%s510 + $0x618] sm:$0xff]
        %v864 = vld [vmem:[%s510 + $0x620] sm:$0xff]
        %v865 = vld [vmem:[%s510 + $0x628] sm:$0xff]
        %v866 = vld [vmem:[%s510 + $0x630] sm:$0xff]
        %v867 = vld [vmem:[%s510 + $0x638] sm:$0xff]
        %v868 = vld [vmem:[%s510 + $0x640] sm:$0xff]
        %v869 = vld [vmem:[%s510 + $0x648] sm:$0xff]
        %v870 = vld [vmem:[%s510 + $0x650] sm:$0xff]
        %v871 = vld [vmem:[%s510 + $0x658] sm:$0xff]
        %v872 = vld [vmem:[%s510 + $0x660] sm:$0xff]
        %v873 = vld [vmem:[%s510 + $0x668] sm:$0xff]
        %v874 = vld [vmem:[%s510 + $0x670] sm:$0xff]
        %v875 = vld [vmem:[%s510 + $0x678] sm:$0xff]
        %v876 = vld [vmem:[%s510 + $0x680] sm:$0xff]
        %v877 = vld [vmem:[%s510 + $0x688] sm:$0xff]
        %v878 = vld [vmem:[%s510 + $0x690] sm:$0xff]
        %v879 = vld [vmem:[%s510 + $0x698] sm:$0xff]
        %v880 = vld [vmem:[%s510 + $0x6a0] sm:$0xff]
        %v881 = vld [vmem:[%s510 + $0x6a8] sm:$0xff]
        %v882 = vld [vmem:[%s510 + $0x6b0] sm:$0xff]
        %v883 = vld [vmem:[%s510 + $0x6b8] sm:$0xff]
        %v884 = vld [vmem:[%s510 + $0x6c0] sm:$0xff]
        %v885 = vld [vmem:[%s510 + $0x6c8] sm:$0xff]
        %v886 = vld [vmem:[%s510 + $0x6d0] sm:$0xff]
        %v887 = vld [vmem:[%s510 + $0x6d8] sm:$0xff]
        %v888 = vld [vmem:[%s510 + $0x6e0] sm:$0xff]
        %v889 = vld [vmem:[%s510 + $0x6e8] sm:$0xff]
        %v890 = vld [vmem:[%s510 + $0x6f0] sm:$0xff]
        %v891 = vld [vmem:[%s510 + $0x6f8] sm:$0xff]
        %v892 = vld [vmem:[%s510 + $0x700] sm:$0xff]
        %v893 = vld [vmem:[%s510 + $0x708] sm:$0xff]
        %v894 = vld [vmem:[%s510 + $0x710] sm:$0xff]
        %v895 = vld [vmem:[%s510 + $0x718] sm:$0xff]
        %v896 = vld [vmem:[%s510 + $0x720] sm:$0xff]
        %v897 = vld [vmem:[%s510 + $0x728] sm:$0xff]
        %v898 = vld [vmem:[%s510 + $0x730] sm:$0xff]
        %v899 = vld [vmem:[%s510 + $0x738] sm:$0xff]
        %v900 = vld [vmem:[%s510 + $0x740] sm:$0xff]
        %v901 = vld [vmem:[%s510 + $0x748] sm:$0xff]
        %v902 = vld [vmem:[%s510 + $0x750] sm:$0xff]
        %v903 = vld [vmem:[%s510 + $0x758] sm:$0xff]
        %v904 = vld [vmem:[%s510 + $0x760] sm:$0xff]
        %v905 = vld [vmem:[%s510 + $0x768] sm:$0xff]
        %v906 = vld [vmem:[%s510 + $0x770] sm:$0xff]
        %v907 = vld [vmem:[%s510 + $0x778] sm:$0xff]
        %v908 = vld [vmem:[%s510 + $0x780] sm:$0xff]
        %v909 = vld [vmem:[%s510 + $0x788] sm:$0xff]
        %v910 = vld [vmem:[%s510 + $0x790] sm:$0xff]
        %v911 = vld [vmem:[%s510 + $0x798] sm:$0xff]
        %v912 = vld [vmem:[%s510 + $0x7a0] sm:$0xff]
        %v913 = vld [vmem:[%s510 + $0x7a8] sm:$0xff]
        %v914 = vld [vmem:[%s510 + $0x7b0] sm:$0xff]
        %v915 = vld [vmem:[%s510 + $0x7b8] sm:$0xff]
        %v916 = vld [vmem:[%s510 + $0x7c0] sm:$0xff]
        %v917 = vld [vmem:[%s510 + $0x7c8] sm:$0xff]
        %v918 = vld [vmem:[%s510 + $0x7d0] sm:$0xff]
        %v919 = vld [vmem:[%s510 + $0x7d8] sm:$0xff]
        %v920 = vld [vmem:[%s510 + $0x7e0] sm:$0xff]
        %v921 = vld [vmem:[%s510 + $0x7e8] sm:$0xff]
        %v922 = vld [vmem:[%s510 + $0x7f0] sm:$0xff]
        %v923 = vld [vmem:[%s510 + $0x7f8] sm:$0xff]
        %v924 = vunpack.c.l.bf16 %v668
        %v925 = vunpack.c.h.bf16 %v668
        %v926 = vunpack.c.l.bf16 %v669
        %v927 = vunpack.c.h.bf16 %v669
        %v928 = vunpack.c.l.bf16 %v670
        %v929 = vunpack.c.h.bf16 %v670
        %v930 = vunpack.c.l.bf16 %v671
        %v931 = vunpack.c.h.bf16 %v671
        %v932 = vunpack.c.l.bf16 %v672
        %v933 = vunpack.c.h.bf16 %v672
        %v934 = vunpack.c.l.bf16 %v673
        %v935 = vunpack.c.h.bf16 %v673
        %v936 = vunpack.c.l.bf16 %v674
        %v937 = vunpack.c.h.bf16 %v674
        %v938 = vunpack.c.l.bf16 %v675
        %v939 = vunpack.c.h.bf16 %v675
        %v940 = vunpack.c.l.bf16 %v676
        %v941 = vunpack.c.h.bf16 %v676
        %v942 = vunpack.c.l.bf16 %v677
        %v943 = vunpack.c.h.bf16 %v677
        %v944 = vunpack.c.l.bf16 %v678
        %v945 = vunpack.c.h.bf16 %v678
        %v946 = vunpack.c.l.bf16 %v679
        %v947 = vunpack.c.h.bf16 %v679
        %v948 = vunpack.c.l.bf16 %v680
        %v949 = vunpack.c.h.bf16 %v680
        %v950 = vunpack.c.l.bf16 %v681
        %v951 = vunpack.c.h.bf16 %v681
        %v952 = vunpack.c.l.bf16 %v682
        %v953 = vunpack.c.h.bf16 %v682
        %v954 = vunpack.c.l.bf16 %v683
        %v955 = vunpack.c.h.bf16 %v683
        %v956 = vunpack.c.l.bf16 %v684
        %v957 = vunpack.c.h.bf16 %v684
        %v958 = vunpack.c.l.bf16 %v685
        %v959 = vunpack.c.h.bf16 %v685
        %v960 = vunpack.c.l.bf16 %v686
        %v961 = vunpack.c.h.bf16 %v686
        %v962 = vunpack.c.l.bf16 %v687
        %v963 = vunpack.c.h.bf16 %v687
        %v964 = vunpack.c.l.bf16 %v688
        %v965 = vunpack.c.h.bf16 %v688
        %v966 = vunpack.c.l.bf16 %v689
        %v967 = vunpack.c.h.bf16 %v689
        %v968 = vunpack.c.l.bf16 %v690
        %v969 = vunpack.c.h.bf16 %v690
        %v970 = vunpack.c.l.bf16 %v691
        %v971 = vunpack.c.h.bf16 %v691
        %v972 = vunpack.c.l.bf16 %v692
        %v973 = vunpack.c.h.bf16 %v692
        %v974 = vunpack.c.l.bf16 %v693
        %v975 = vunpack.c.h.bf16 %v693
        %v976 = vunpack.c.l.bf16 %v694
        %v977 = vunpack.c.h.bf16 %v694
        %v978 = vunpack.c.l.bf16 %v695
        %v979 = vunpack.c.h.bf16 %v695
        %v980 = vunpack.c.l.bf16 %v696
        %v981 = vunpack.c.h.bf16 %v696
        %v982 = vunpack.c.l.bf16 %v697
        %v983 = vunpack.c.h.bf16 %v697
        %v984 = vunpack.c.l.bf16 %v698
        %v985 = vunpack.c.h.bf16 %v698
        %v986 = vunpack.c.l.bf16 %v699
        %v987 = vunpack.c.h.bf16 %v699
        %v988 = vunpack.c.l.bf16 %v700
        %v989 = vunpack.c.h.bf16 %v700
        %v990 = vunpack.c.l.bf16 %v701
        %v991 = vunpack.c.h.bf16 %v701
        %v992 = vunpack.c.l.bf16 %v702
        %v993 = vunpack.c.h.bf16 %v702
        %v994 = vunpack.c.l.bf16 %v703
        %v995 = vunpack.c.h.bf16 %v703
        %v996 = vunpack.c.l.bf16 %v704
        %v997 = vunpack.c.h.bf16 %v704
        %v998 = vunpack.c.l.bf16 %v705
        %v999 = vunpack.c.h.bf16 %v705
        %v1000 = vunpack.c.l.bf16 %v706
        %v1001 = vunpack.c.h.bf16 %v706
        %v1002 = vunpack.c.l.bf16 %v707
        %v1003 = vunpack.c.h.bf16 %v707
        %v1004 = vunpack.c.l.bf16 %v708
        %v1005 = vunpack.c.h.bf16 %v708
        %v1006 = vunpack.c.l.bf16 %v709
        %v1007 = vunpack.c.h.bf16 %v709
        %v1008 = vunpack.c.l.bf16 %v710
        %v1009 = vunpack.c.h.bf16 %v710
        %v1010 = vunpack.c.l.bf16 %v711
        %v1011 = vunpack.c.h.bf16 %v711
        %v1012 = vunpack.c.l.bf16 %v712
        %v1013 = vunpack.c.h.bf16 %v712
        %v1014 = vunpack.c.l.bf16 %v713
        %v1015 = vunpack.c.h.bf16 %v713
        %v1016 = vunpack.c.l.bf16 %v714
        %v1017 = vunpack.c.h.bf16 %v714
        %v1018 = vunpack.c.l.bf16 %v715
        %v1019 = vunpack.c.h.bf16 %v715
        %v1020 = vunpack.c.l.bf16 %v716
        %v1021 = vunpack.c.h.bf16 %v716
        %v1022 = vunpack.c.l.bf16 %v717
        %v1023 = vunpack.c.h.bf16 %v717
        %v1024 = vunpack.c.l.bf16 %v718
        %v1025 = vunpack.c.h.bf16 %v718
        %v1026 = vunpack.c.l.bf16 %v719
        %v1027 = vunpack.c.h.bf16 %v719
        %v1028 = vunpack.c.l.bf16 %v720
        %v1029 = vunpack.c.h.bf16 %v720
        %v1030 = vunpack.c.l.bf16 %v721
        %v1031 = vunpack.c.h.bf16 %v721
        %v1032 = vunpack.c.l.bf16 %v722
        %v1033 = vunpack.c.h.bf16 %v722
        %v1034 = vunpack.c.l.bf16 %v723
        %v1035 = vunpack.c.h.bf16 %v723
        %v1036 = vunpack.c.l.bf16 %v724
        %v1037 = vunpack.c.h.bf16 %v724
        %v1038 = vunpack.c.l.bf16 %v725
        %v1039 = vunpack.c.h.bf16 %v725
        %v1040 = vunpack.c.l.bf16 %v726
        %v1041 = vunpack.c.h.bf16 %v726
        %v1042 = vunpack.c.l.bf16 %v727
        %v1043 = vunpack.c.h.bf16 %v727
        %v1044 = vunpack.c.l.bf16 %v728
        %v1045 = vunpack.c.h.bf16 %v728
        %v1046 = vunpack.c.l.bf16 %v729
        %v1047 = vunpack.c.h.bf16 %v729
        %v1048 = vunpack.c.l.bf16 %v730
        %v1049 = vunpack.c.h.bf16 %v730
        %v1050 = vunpack.c.l.bf16 %v731
        %v1051 = vunpack.c.h.bf16 %v731
        %v1052 = vunpack.c.l.bf16 %v732
        %v1053 = vunpack.c.h.bf16 %v732
        %v1054 = vunpack.c.l.bf16 %v733
        %v1055 = vunpack.c.h.bf16 %v733
        %v1056 = vunpack.c.l.bf16 %v734
        %v1057 = vunpack.c.h.bf16 %v734
        %v1058 = vunpack.c.l.bf16 %v735
        %v1059 = vunpack.c.h.bf16 %v735
        %v1060 = vunpack.c.l.bf16 %v736
        %v1061 = vunpack.c.h.bf16 %v736
        %v1062 = vunpack.c.l.bf16 %v737
        %v1063 = vunpack.c.h.bf16 %v737
        %v1064 = vunpack.c.l.bf16 %v738
        %v1065 = vunpack.c.h.bf16 %v738
        %v1066 = vunpack.c.l.bf16 %v739
        %v1067 = vunpack.c.h.bf16 %v739
        %v1068 = vunpack.c.l.bf16 %v740
        %v1069 = vunpack.c.h.bf16 %v740
        %v1070 = vunpack.c.l.bf16 %v741
        %v1071 = vunpack.c.h.bf16 %v741
        %v1072 = vunpack.c.l.bf16 %v742
        %v1073 = vunpack.c.h.bf16 %v742
        %v1074 = vunpack.c.l.bf16 %v743
        %v1075 = vunpack.c.h.bf16 %v743
        %v1076 = vunpack.c.l.bf16 %v744
        %v1077 = vunpack.c.h.bf16 %v744
        %v1078 = vunpack.c.l.bf16 %v745
        %v1079 = vunpack.c.h.bf16 %v745
        %v1080 = vunpack.c.l.bf16 %v746
        %v1081 = vunpack.c.h.bf16 %v746
        %v1082 = vunpack.c.l.bf16 %v747
        %v1083 = vunpack.c.h.bf16 %v747
        %v1084 = vunpack.c.l.bf16 %v748
        %v1085 = vunpack.c.h.bf16 %v748
        %v1086 = vunpack.c.l.bf16 %v749
        %v1087 = vunpack.c.h.bf16 %v749
        %v1088 = vunpack.c.l.bf16 %v750
        %v1089 = vunpack.c.h.bf16 %v750
        %v1090 = vunpack.c.l.bf16 %v751
        %v1091 = vunpack.c.h.bf16 %v751
        %v1092 = vunpack.c.l.bf16 %v752
        %v1093 = vunpack.c.h.bf16 %v752
        %v1094 = vunpack.c.l.bf16 %v753
        %v1095 = vunpack.c.h.bf16 %v753
        %v1096 = vunpack.c.l.bf16 %v754
        %v1097 = vunpack.c.h.bf16 %v754
        %v1098 = vunpack.c.l.bf16 %v755
        %v1099 = vunpack.c.h.bf16 %v755
        %v1100 = vunpack.c.l.bf16 %v756
        %v1101 = vunpack.c.h.bf16 %v756
        %v1102 = vunpack.c.l.bf16 %v757
        %v1103 = vunpack.c.h.bf16 %v757
        %v1104 = vunpack.c.l.bf16 %v758
        %v1105 = vunpack.c.h.bf16 %v758
        %v1106 = vunpack.c.l.bf16 %v759
        %v1107 = vunpack.c.h.bf16 %v759
        %v1108 = vunpack.c.l.bf16 %v760
        %v1109 = vunpack.c.h.bf16 %v760
        %v1110 = vunpack.c.l.bf16 %v761
        %v1111 = vunpack.c.h.bf16 %v761
        %v1112 = vunpack.c.l.bf16 %v762
        %v1113 = vunpack.c.h.bf16 %v762
        %v1114 = vunpack.c.l.bf16 %v763
        %v1115 = vunpack.c.h.bf16 %v763
        %v1116 = vunpack.c.l.bf16 %v764
        %v1117 = vunpack.c.h.bf16 %v764
        %v1118 = vunpack.c.l.bf16 %v765
        %v1119 = vunpack.c.h.bf16 %v765
        %v1120 = vunpack.c.l.bf16 %v766
        %v1121 = vunpack.c.h.bf16 %v766
        %v1122 = vunpack.c.l.bf16 %v767
        %v1123 = vunpack.c.h.bf16 %v767
        %v1124 = vunpack.c.l.bf16 %v768
        %v1125 = vunpack.c.h.bf16 %v768
        %v1126 = vunpack.c.l.bf16 %v769
        %v1127 = vunpack.c.h.bf16 %v769
        %v1128 = vunpack.c.l.bf16 %v770
        %v1129 = vunpack.c.h.bf16 %v770
        %v1130 = vunpack.c.l.bf16 %v771
        %v1131 = vunpack.c.h.bf16 %v771
        %v1132 = vunpack.c.l.bf16 %v772
        %v1133 = vunpack.c.h.bf16 %v772
        %v1134 = vunpack.c.l.bf16 %v773
        %v1135 = vunpack.c.h.bf16 %v773
        %v1136 = vunpack.c.l.bf16 %v774
        %v1137 = vunpack.c.h.bf16 %v774
        %v1138 = vunpack.c.l.bf16 %v775
        %v1139 = vunpack.c.h.bf16 %v775
        %v1140 = vunpack.c.l.bf16 %v776
        %v1141 = vunpack.c.h.bf16 %v776
        %v1142 = vunpack.c.l.bf16 %v777
        %v1143 = vunpack.c.h.bf16 %v777
        %v1144 = vunpack.c.l.bf16 %v778
        %v1145 = vunpack.c.h.bf16 %v778
        %v1146 = vunpack.c.l.bf16 %v779
        %v1147 = vunpack.c.h.bf16 %v779
        %v1148 = vunpack.c.l.bf16 %v780
        %v1149 = vunpack.c.h.bf16 %v780
        %v1150 = vunpack.c.l.bf16 %v781
        %v1151 = vunpack.c.h.bf16 %v781
        %v1152 = vunpack.c.l.bf16 %v782
        %v1153 = vunpack.c.h.bf16 %v782
        %v1154 = vunpack.c.l.bf16 %v783
        %v1155 = vunpack.c.h.bf16 %v783
        %v1156 = vunpack.c.l.bf16 %v784
        %v1157 = vunpack.c.h.bf16 %v784
        %v1158 = vunpack.c.l.bf16 %v785
        %v1159 = vunpack.c.h.bf16 %v785
        %v1160 = vunpack.c.l.bf16 %v786
        %v1161 = vunpack.c.h.bf16 %v786
        %v1162 = vunpack.c.l.bf16 %v787
        %v1163 = vunpack.c.h.bf16 %v787
        %v1164 = vunpack.c.l.bf16 %v788
        %v1165 = vunpack.c.h.bf16 %v788
        %v1166 = vunpack.c.l.bf16 %v789
        %v1167 = vunpack.c.h.bf16 %v789
        %v1168 = vunpack.c.l.bf16 %v790
        %v1169 = vunpack.c.h.bf16 %v790
        %v1170 = vunpack.c.l.bf16 %v791
        %v1171 = vunpack.c.h.bf16 %v791
        %v1172 = vunpack.c.l.bf16 %v792
        %v1173 = vunpack.c.h.bf16 %v792
        %v1174 = vunpack.c.l.bf16 %v793
        %v1175 = vunpack.c.h.bf16 %v793
        %v1176 = vunpack.c.l.bf16 %v794
        %v1177 = vunpack.c.h.bf16 %v794
        %v1178 = vunpack.c.l.bf16 %v795
        %v1179 = vunpack.c.h.bf16 %v795
        %v1180 = vunpack.c.l.bf16 %v796
        %v1181 = vunpack.c.h.bf16 %v796
        %v1182 = vunpack.c.l.bf16 %v797
        %v1183 = vunpack.c.h.bf16 %v797
        %v1184 = vunpack.c.l.bf16 %v798
        %v1185 = vunpack.c.h.bf16 %v798
        %v1186 = vunpack.c.l.bf16 %v799
        %v1187 = vunpack.c.h.bf16 %v799
        %v1188 = vunpack.c.l.bf16 %v800
        %v1189 = vunpack.c.h.bf16 %v800
        %v1190 = vunpack.c.l.bf16 %v801
        %v1191 = vunpack.c.h.bf16 %v801
        %v1192 = vunpack.c.l.bf16 %v802
        %v1193 = vunpack.c.h.bf16 %v802
        %v1194 = vunpack.c.l.bf16 %v803
        %v1195 = vunpack.c.h.bf16 %v803
        %v1196 = vunpack.c.l.bf16 %v804
        %v1197 = vunpack.c.h.bf16 %v804
        %v1198 = vunpack.c.l.bf16 %v805
        %v1199 = vunpack.c.h.bf16 %v805
        %v1200 = vunpack.c.l.bf16 %v806
        %v1201 = vunpack.c.h.bf16 %v806
        %v1202 = vunpack.c.l.bf16 %v807
        %v1203 = vunpack.c.h.bf16 %v807
        %v1204 = vunpack.c.l.bf16 %v808
        %v1205 = vunpack.c.h.bf16 %v808
        %v1206 = vunpack.c.l.bf16 %v809
        %v1207 = vunpack.c.h.bf16 %v809
        %v1208 = vunpack.c.l.bf16 %v810
        %v1209 = vunpack.c.h.bf16 %v810
        %v1210 = vunpack.c.l.bf16 %v811
        %v1211 = vunpack.c.h.bf16 %v811
        %v1212 = vunpack.c.l.bf16 %v812
        %v1213 = vunpack.c.h.bf16 %v812
        %v1214 = vunpack.c.l.bf16 %v813
        %v1215 = vunpack.c.h.bf16 %v813
        %v1216 = vunpack.c.l.bf16 %v814
        %v1217 = vunpack.c.h.bf16 %v814
        %v1218 = vunpack.c.l.bf16 %v815
        %v1219 = vunpack.c.h.bf16 %v815
        %v1220 = vunpack.c.l.bf16 %v816
        %v1221 = vunpack.c.h.bf16 %v816
        %v1222 = vunpack.c.l.bf16 %v817
        %v1223 = vunpack.c.h.bf16 %v817
        %v1224 = vunpack.c.l.bf16 %v818
        %v1225 = vunpack.c.h.bf16 %v818
        %v1226 = vunpack.c.l.bf16 %v819
        %v1227 = vunpack.c.h.bf16 %v819
        %v1228 = vunpack.c.l.bf16 %v820
        %v1229 = vunpack.c.h.bf16 %v820
        %v1230 = vunpack.c.l.bf16 %v821
        %v1231 = vunpack.c.h.bf16 %v821
        %v1232 = vunpack.c.l.bf16 %v822
        %v1233 = vunpack.c.h.bf16 %v822
        %v1234 = vunpack.c.l.bf16 %v823
        %v1235 = vunpack.c.h.bf16 %v823
        %v1236 = vunpack.c.l.bf16 %v824
        %v1237 = vunpack.c.h.bf16 %v824
        %v1238 = vunpack.c.l.bf16 %v825
        %v1239 = vunpack.c.h.bf16 %v825
        %v1240 = vunpack.c.l.bf16 %v826
        %v1241 = vunpack.c.h.bf16 %v826
        %v1242 = vunpack.c.l.bf16 %v827
        %v1243 = vunpack.c.h.bf16 %v827
        %v1244 = vunpack.c.l.bf16 %v828
        %v1245 = vunpack.c.h.bf16 %v828
        %v1246 = vunpack.c.l.bf16 %v829
        %v1247 = vunpack.c.h.bf16 %v829
        %v1248 = vunpack.c.l.bf16 %v830
        %v1249 = vunpack.c.h.bf16 %v830
        %v1250 = vunpack.c.l.bf16 %v831
        %v1251 = vunpack.c.h.bf16 %v831
        %v1252 = vunpack.c.l.bf16 %v832
        %v1253 = vunpack.c.h.bf16 %v832
        %v1254 = vunpack.c.l.bf16 %v833
        %v1255 = vunpack.c.h.bf16 %v833
        %v1256 = vunpack.c.l.bf16 %v834
        %v1257 = vunpack.c.h.bf16 %v834
        %v1258 = vunpack.c.l.bf16 %v835
        %v1259 = vunpack.c.h.bf16 %v835
        %v1260 = vunpack.c.l.bf16 %v836
        %v1261 = vunpack.c.h.bf16 %v836
        %v1262 = vunpack.c.l.bf16 %v837
        %v1263 = vunpack.c.h.bf16 %v837
        %v1264 = vunpack.c.l.bf16 %v838
        %v1265 = vunpack.c.h.bf16 %v838
        %v1266 = vunpack.c.l.bf16 %v839
        %v1267 = vunpack.c.h.bf16 %v839
        %v1268 = vunpack.c.l.bf16 %v840
        %v1269 = vunpack.c.h.bf16 %v840
        %v1270 = vunpack.c.l.bf16 %v841
        %v1271 = vunpack.c.h.bf16 %v841
        %v1272 = vunpack.c.l.bf16 %v842
        %v1273 = vunpack.c.h.bf16 %v842
        %v1274 = vunpack.c.l.bf16 %v843
        %v1275 = vunpack.c.h.bf16 %v843
        %v1276 = vunpack.c.l.bf16 %v844
        %v1277 = vunpack.c.h.bf16 %v844
        %v1278 = vunpack.c.l.bf16 %v845
        %v1279 = vunpack.c.h.bf16 %v845
        %v1280 = vunpack.c.l.bf16 %v846
        %v1281 = vunpack.c.h.bf16 %v846
        %v1282 = vunpack.c.l.bf16 %v847
        %v1283 = vunpack.c.h.bf16 %v847
        %v1284 = vunpack.c.l.bf16 %v848
        %v1285 = vunpack.c.h.bf16 %v848
        %v1286 = vunpack.c.l.bf16 %v849
        %v1287 = vunpack.c.h.bf16 %v849
        %v1288 = vunpack.c.l.bf16 %v850
        %v1289 = vunpack.c.h.bf16 %v850
        %v1290 = vunpack.c.l.bf16 %v851
        %v1291 = vunpack.c.h.bf16 %v851
        %v1292 = vunpack.c.l.bf16 %v852
        %v1293 = vunpack.c.h.bf16 %v852
        %v1294 = vunpack.c.l.bf16 %v853
        %v1295 = vunpack.c.h.bf16 %v853
        %v1296 = vunpack.c.l.bf16 %v854
        %v1297 = vunpack.c.h.bf16 %v854
        %v1298 = vunpack.c.l.bf16 %v855
        %v1299 = vunpack.c.h.bf16 %v855
        %v1300 = vunpack.c.l.bf16 %v856
        %v1301 = vunpack.c.h.bf16 %v856
        %v1302 = vunpack.c.l.bf16 %v857
        %v1303 = vunpack.c.h.bf16 %v857
        %v1304 = vunpack.c.l.bf16 %v858
        %v1305 = vunpack.c.h.bf16 %v858
        %v1306 = vunpack.c.l.bf16 %v859
        %v1307 = vunpack.c.h.bf16 %v859
        %v1308 = vunpack.c.l.bf16 %v860
        %v1309 = vunpack.c.h.bf16 %v860
        %v1310 = vunpack.c.l.bf16 %v861
        %v1311 = vunpack.c.h.bf16 %v861
        %v1312 = vunpack.c.l.bf16 %v862
        %v1313 = vunpack.c.h.bf16 %v862
        %v1314 = vunpack.c.l.bf16 %v863
        %v1315 = vunpack.c.h.bf16 %v863
        %v1316 = vunpack.c.l.bf16 %v864
        %v1317 = vunpack.c.h.bf16 %v864
        %v1318 = vunpack.c.l.bf16 %v865
        %v1319 = vunpack.c.h.bf16 %v865
        %v1320 = vunpack.c.l.bf16 %v866
        %v1321 = vunpack.c.h.bf16 %v866
        %v1322 = vunpack.c.l.bf16 %v867
        %v1323 = vunpack.c.h.bf16 %v867
        %v1324 = vunpack.c.l.bf16 %v868
        %v1325 = vunpack.c.h.bf16 %v868
        %v1326 = vunpack.c.l.bf16 %v869
        %v1327 = vunpack.c.h.bf16 %v869
        %v1328 = vunpack.c.l.bf16 %v870
        %v1329 = vunpack.c.h.bf16 %v870
        %v1330 = vunpack.c.l.bf16 %v871
        %v1331 = vunpack.c.h.bf16 %v871
        %v1332 = vunpack.c.l.bf16 %v872
        %v1333 = vunpack.c.h.bf16 %v872
        %v1334 = vunpack.c.l.bf16 %v873
        %v1335 = vunpack.c.h.bf16 %v873
        %v1336 = vunpack.c.l.bf16 %v874
        %v1337 = vunpack.c.h.bf16 %v874
        %v1338 = vunpack.c.l.bf16 %v875
        %v1339 = vunpack.c.h.bf16 %v875
        %v1340 = vunpack.c.l.bf16 %v876
        %v1341 = vunpack.c.h.bf16 %v876
        %v1342 = vunpack.c.l.bf16 %v877
        %v1343 = vunpack.c.h.bf16 %v877
        %v1344 = vunpack.c.l.bf16 %v878
        %v1345 = vunpack.c.h.bf16 %v878
        %v1346 = vunpack.c.l.bf16 %v879
        %v1347 = vunpack.c.h.bf16 %v879
        %v1348 = vunpack.c.l.bf16 %v880
        %v1349 = vunpack.c.h.bf16 %v880
        %v1350 = vunpack.c.l.bf16 %v881
        %v1351 = vunpack.c.h.bf16 %v881
        %v1352 = vunpack.c.l.bf16 %v882
        %v1353 = vunpack.c.h.bf16 %v882
        %v1354 = vunpack.c.l.bf16 %v883
        %v1355 = vunpack.c.h.bf16 %v883
        %v1356 = vunpack.c.l.bf16 %v884
        %v1357 = vunpack.c.h.bf16 %v884
        %v1358 = vunpack.c.l.bf16 %v885
        %v1359 = vunpack.c.h.bf16 %v885
        %v1360 = vunpack.c.l.bf16 %v886
        %v1361 = vunpack.c.h.bf16 %v886
        %v1362 = vunpack.c.l.bf16 %v887
        %v1363 = vunpack.c.h.bf16 %v887
        %v1364 = vunpack.c.l.bf16 %v888
        %v1365 = vunpack.c.h.bf16 %v888
        %v1366 = vunpack.c.l.bf16 %v889
        %v1367 = vunpack.c.h.bf16 %v889
        %v1368 = vunpack.c.l.bf16 %v890
        %v1369 = vunpack.c.h.bf16 %v890
        %v1370 = vunpack.c.l.bf16 %v891
        %v1371 = vunpack.c.h.bf16 %v891
        %v1372 = vunpack.c.l.bf16 %v892
        %v1373 = vunpack.c.h.bf16 %v892
        %v1374 = vunpack.c.l.bf16 %v893
        %v1375 = vunpack.c.h.bf16 %v893
        %v1376 = vunpack.c.l.bf16 %v894
        %v1377 = vunpack.c.h.bf16 %v894
        %v1378 = vunpack.c.l.bf16 %v895
        %v1379 = vunpack.c.h.bf16 %v895
        %v1380 = vunpack.c.l.bf16 %v896
        %v1381 = vunpack.c.h.bf16 %v896
        %v1382 = vunpack.c.l.bf16 %v897
        %v1383 = vunpack.c.h.bf16 %v897
        %v1384 = vunpack.c.l.bf16 %v898
        %v1385 = vunpack.c.h.bf16 %v898
        %v1386 = vunpack.c.l.bf16 %v899
        %v1387 = vunpack.c.h.bf16 %v899
        %v1388 = vunpack.c.l.bf16 %v900
        %v1389 = vunpack.c.h.bf16 %v900
        %v1390 = vunpack.c.l.bf16 %v901
        %v1391 = vunpack.c.h.bf16 %v901
        %v1392 = vunpack.c.l.bf16 %v902
        %v1393 = vunpack.c.h.bf16 %v902
        %v1394 = vunpack.c.l.bf16 %v903
        %v1395 = vunpack.c.h.bf16 %v903
        %v1396 = vunpack.c.l.bf16 %v904
        %v1397 = vunpack.c.h.bf16 %v904
        %v1398 = vunpack.c.l.bf16 %v905
        %v1399 = vunpack.c.h.bf16 %v905
        %v1400 = vunpack.c.l.bf16 %v906
        %v1401 = vunpack.c.h.bf16 %v906
        %v1402 = vunpack.c.l.bf16 %v907
        %v1403 = vunpack.c.h.bf16 %v907
        %v1404 = vunpack.c.l.bf16 %v908
        %v1405 = vunpack.c.h.bf16 %v908
        %v1406 = vunpack.c.l.bf16 %v909
        %v1407 = vunpack.c.h.bf16 %v909
        %v1408 = vunpack.c.l.bf16 %v910
        %v1409 = vunpack.c.h.bf16 %v910
        %v1410 = vunpack.c.l.bf16 %v911
        %v1411 = vunpack.c.h.bf16 %v911
        %v1412 = vunpack.c.l.bf16 %v912
        %v1413 = vunpack.c.h.bf16 %v912
        %v1414 = vunpack.c.l.bf16 %v913
        %v1415 = vunpack.c.h.bf16 %v913
        %v1416 = vunpack.c.l.bf16 %v914
        %v1417 = vunpack.c.h.bf16 %v914
        %v1418 = vunpack.c.l.bf16 %v915
        %v1419 = vunpack.c.h.bf16 %v915
        %v1420 = vunpack.c.l.bf16 %v916
        %v1421 = vunpack.c.h.bf16 %v916
        %v1422 = vunpack.c.l.bf16 %v917
        %v1423 = vunpack.c.h.bf16 %v917
        %v1424 = vunpack.c.l.bf16 %v918
        %v1425 = vunpack.c.h.bf16 %v918
        %v1426 = vunpack.c.l.bf16 %v919
        %v1427 = vunpack.c.h.bf16 %v919
        %v1428 = vunpack.c.l.bf16 %v920
        %v1429 = vunpack.c.h.bf16 %v920
        %v1430 = vunpack.c.l.bf16 %v921
        %v1431 = vunpack.c.h.bf16 %v921
        %v1432 = vunpack.c.l.bf16 %v922
        %v1433 = vunpack.c.h.bf16 %v922
        %v1434 = vunpack.c.l.bf16 %v923
        %v1435 = vunpack.c.h.bf16 %v923
        %v1436 = vld [vmem:[%s519] sm:$0xf]
        %v1438 = vlaneseq
        %v1439 = vshrl.u32 %v1438, 7
        %v1440 = vsub.s32 0, %v1439
        %v1441 = vrot.slane %v1436, %v1440
        %v1442 = vlaneseq
        %v1443 = vshrl.u32 %v1442, 7
        %v1444 = vsub.s32 1, %v1443
        %v1445 = vrot.slane %v1436, %v1444
        %v1446 = vlaneseq
        %v1447 = vshrl.u32 %v1446, 7
        %v1448 = vsub.s32 2, %v1447
        %v1449 = vrot.slane %v1436, %v1448
        %v1450 = vlaneseq
        %v1451 = vshrl.u32 %v1450, 7
        %v1452 = vsub.s32 3, %v1451
        %v1453 = vrot.slane %v1436, %v1452
        %1458 = vmatprep.subr.mxu0 %v925
        %1459 = vmatpush1.msra.mxu0 %v924
        %1460 = vmatprep.subr.mxu0 %v929
        %1461 = vmatpush1.msra.mxu0 %v928
        %1462 = vmatprep.subr.mxu0 %v933
        %1463 = vmatpush1.msra.mxu0 %v932
        %1464 = vmatprep.subr.mxu0 %v937
        %1465 = vmatpush1.msra.mxu0 %v936
        %1466 = vmatprep.subr.mxu0 %v941
        %1467 = vmatpush1.msra.mxu0 %v940
        %1468 = vmatprep.subr.mxu0 %v945
        %1469 = vmatpush1.msra.mxu0 %v944
        %1470 = vmatprep.subr.mxu0 %v949
        %1471 = vmatpush1.msra.mxu0 %v948
        %1472 = vmatprep.subr.mxu0 %v953
        %1473 = vmatpush1.msra.mxu0 %v952
        %1474 = vmatprep.subr.mxu0 %v957
        %1475 = vmatpush1.msra.mxu0 %v956
        %1476 = vmatprep.subr.mxu0 %v961
        %1477 = vmatpush1.msra.mxu0 %v960
        %1478 = vmatprep.subr.mxu0 %v965
        %1479 = vmatpush1.msra.mxu0 %v964
        %1480 = vmatprep.subr.mxu0 %v969
        %1481 = vmatpush1.msra.mxu0 %v968
        %1482 = vmatprep.subr.mxu0 %v973
        %1483 = vmatpush1.msra.mxu0 %v972
        %1484 = vmatprep.subr.mxu0 %v977
        %1485 = vmatpush1.msra.mxu0 %v976
        %1486 = vmatprep.subr.mxu0 %v981
        %1487 = vmatpush1.msra.mxu0 %v980
        %1488 = vmatprep.subr.mxu0 %v985
        %1489 = vmatpush1.msra.mxu0 %v984
        %1490 = vmatprep.subr.mxu0 %v989
        %1491 = vmatpush1.msra.mxu0 %v988
        %1492 = vmatprep.subr.mxu0 %v993
        %1493 = vmatpush1.msra.mxu0 %v992
        %1494 = vmatprep.subr.mxu0 %v997
        %1495 = vmatpush1.msra.mxu0 %v996
        %1496 = vmatprep.subr.mxu0 %v1001
        %1497 = vmatpush1.msra.mxu0 %v1000
        %1498 = vmatprep.subr.mxu0 %v1005
        %1499 = vmatpush1.msra.mxu0 %v1004
        %1500 = vmatprep.subr.mxu0 %v1009
        %1501 = vmatpush1.msra.mxu0 %v1008
        %1502 = vmatprep.subr.mxu0 %v1013
        %1503 = vmatpush1.msra.mxu0 %v1012
        %1504 = vmatprep.subr.mxu0 %v1017
        %1505 = vmatpush1.msra.mxu0 %v1016
        %1506 = vmatprep.subr.mxu0 %v1021
        %1507 = vmatpush1.msra.mxu0 %v1020
        %1508 = vmatprep.subr.mxu0 %v1025
        %1509 = vmatpush1.msra.mxu0 %v1024
        %1510 = vmatprep.subr.mxu0 %v1029
        %1511 = vmatpush1.msra.mxu0 %v1028
        %1512 = vmatprep.subr.mxu0 %v1033
        %1513 = vmatpush1.msra.mxu0 %v1032
        %1514 = vmatprep.subr.mxu0 %v1037
        %1515 = vmatpush1.msra.mxu0 %v1036
        %1516 = vmatprep.subr.mxu0 %v1041
        %1517 = vmatpush1.msra.mxu0 %v1040
        %1518 = vmatprep.subr.mxu0 %v1045
        %1519 = vmatpush1.msra.mxu0 %v1044
        %1520 = vmatprep.subr.mxu0 %v1049
        %1521 = vmatpush1.msra.mxu0 %v1048
        %1522 = vmatprep.mubr.f32.mxu0 %v661
        %1523 = vmatmul.mubr.f32.gmra.mrb[0].mxu0 %v660
        %v1524 = vpop.f32.mrb[0].mxu0
        %v1525 = vadd.f32 %v1441, %v1524
        %v1526 = vpop.f32.mrb[0].mxu0
        %v1527 = vadd.f32 %v1445, %v1526
        %1528 = vdwg.mxu0
        %1529 = vmatprep.subr.mxu0 %v1053
        %1530 = vmatpush1.msra.mxu0 %v1052
        %1531 = vmatprep.subr.mxu0 %v1057
        %1532 = vmatpush1.msra.mxu0 %v1056
        %1533 = vmatprep.subr.mxu0 %v1061
        %1534 = vmatpush1.msra.mxu0 %v1060
        %1535 = vmatprep.subr.mxu0 %v1065
        %1536 = vmatpush1.msra.mxu0 %v1064
        %1537 = vmatprep.subr.mxu0 %v1069
        %1538 = vmatpush1.msra.mxu0 %v1068
        %1539 = vmatprep.subr.mxu0 %v1073
        %1540 = vmatpush1.msra.mxu0 %v1072
        %1541 = vmatprep.subr.mxu0 %v1077
        %1542 = vmatpush1.msra.mxu0 %v1076
        %1543 = vmatprep.subr.mxu0 %v1081
        %1544 = vmatpush1.msra.mxu0 %v1080
        %1545 = vmatprep.subr.mxu0 %v1085
        %1546 = vmatpush1.msra.mxu0 %v1084
        %1547 = vmatprep.subr.mxu0 %v1089
        %1548 = vmatpush1.msra.mxu0 %v1088
        %1549 = vmatprep.subr.mxu0 %v1093
        %1550 = vmatpush1.msra.mxu0 %v1092
        %1551 = vmatprep.subr.mxu0 %v1097
        %1552 = vmatpush1.msra.mxu0 %v1096
        %1553 = vmatprep.subr.mxu0 %v1101
        %1554 = vmatpush1.msra.mxu0 %v1100
        %1555 = vmatprep.subr.mxu0 %v1105
        %1556 = vmatpush1.msra.mxu0 %v1104
        %1557 = vmatprep.subr.mxu0 %v1109
        %1558 = vmatpush1.msra.mxu0 %v1108
        %1559 = vmatprep.subr.mxu0 %v1113
        %1560 = vmatpush1.msra.mxu0 %v1112
        %1561 = vmatprep.subr.mxu0 %v1117
        %1562 = vmatpush1.msra.mxu0 %v1116
        %1563 = vmatprep.subr.mxu0 %v1121
        %1564 = vmatpush1.msra.mxu0 %v1120
        %1565 = vmatprep.subr.mxu0 %v1125
        %1566 = vmatpush1.msra.mxu0 %v1124
        %1567 = vmatprep.subr.mxu0 %v1129
        %1568 = vmatpush1.msra.mxu0 %v1128
        %1569 = vmatprep.subr.mxu0 %v1133
        %1570 = vmatpush1.msra.mxu0 %v1132
        %1571 = vmatprep.subr.mxu0 %v1137
        %1572 = vmatpush1.msra.mxu0 %v1136
        %1573 = vmatprep.subr.mxu0 %v1141
        %1574 = vmatpush1.msra.mxu0 %v1140
        %1575 = vmatprep.subr.mxu0 %v1145
        %1576 = vmatpush1.msra.mxu0 %v1144
        %1577 = vmatprep.subr.mxu0 %v1149
        %1578 = vmatpush1.msra.mxu0 %v1148
        %1579 = vmatprep.subr.mxu0 %v1153
        %1580 = vmatpush1.msra.mxu0 %v1152
        %1581 = vmatprep.subr.mxu0 %v1157
        %1582 = vmatpush1.msra.mxu0 %v1156
        %1583 = vmatprep.subr.mxu0 %v1161
        %1584 = vmatpush1.msra.mxu0 %v1160
        %1585 = vmatprep.subr.mxu0 %v1165
        %1586 = vmatpush1.msra.mxu0 %v1164
        %1587 = vmatprep.subr.mxu0 %v1169
        %1588 = vmatpush1.msra.mxu0 %v1168
        %1589 = vmatprep.subr.mxu0 %v1173
        %1590 = vmatpush1.msra.mxu0 %v1172
        %1591 = vmatprep.subr.mxu0 %v1177
        %1592 = vmatpush1.msra.mxu0 %v1176
        %1593 = vmatprep.mubr.f32.mxu0 %v663
        %1594 = vmatmul.mubr.f32.gmra.mrb[0].mxu0 %v662
        %v1595 = vpop.f32.mrb[0].mxu0
        %v1596 = vadd.f32 %v1525, %v1595
        %v1597 = vpop.f32.mrb[0].mxu0
        %v1598 = vadd.f32 %v1527, %v1597
        %1599 = vdwg.mxu0
        %1600 = vmatprep.subr.mxu0 %v1181
        %1601 = vmatpush1.msra.mxu0 %v1180
        %1602 = vmatprep.subr.mxu0 %v1185
        %1603 = vmatpush1.msra.mxu0 %v1184
        %1604 = vmatprep.subr.mxu0 %v1189
        %1605 = vmatpush1.msra.mxu0 %v1188
        %1606 = vmatprep.subr.mxu0 %v1193
        %1607 = vmatpush1.msra.mxu0 %v1192
        %1608 = vmatprep.subr.mxu0 %v1197
        %1609 = vmatpush1.msra.mxu0 %v1196
        %1610 = vmatprep.subr.mxu0 %v1201
        %1611 = vmatpush1.msra.mxu0 %v1200
        %1612 = vmatprep.subr.mxu0 %v1205
        %1613 = vmatpush1.msra.mxu0 %v1204
        %1614 = vmatprep.subr.mxu0 %v1209
        %1615 = vmatpush1.msra.mxu0 %v1208
        %1616 = vmatprep.subr.mxu0 %v1213
        %1617 = vmatpush1.msra.mxu0 %v1212
        %1618 = vmatprep.subr.mxu0 %v1217
        %1619 = vmatpush1.msra.mxu0 %v1216
        %1620 = vmatprep.subr.mxu0 %v1221
        %1621 = vmatpush1.msra.mxu0 %v1220
        %1622 = vmatprep.subr.mxu0 %v1225
        %1623 = vmatpush1.msra.mxu0 %v1224
        %1624 = vmatprep.subr.mxu0 %v1229
        %1625 = vmatpush1.msra.mxu0 %v1228
        %1626 = vmatprep.subr.mxu0 %v1233
        %1627 = vmatpush1.msra.mxu0 %v1232
        %1628 = vmatprep.subr.mxu0 %v1237
        %1629 = vmatpush1.msra.mxu0 %v1236
        %1630 = vmatprep.subr.mxu0 %v1241
        %1631 = vmatpush1.msra.mxu0 %v1240
        %1632 = vmatprep.subr.mxu0 %v1245
        %1633 = vmatpush1.msra.mxu0 %v1244
        %1634 = vmatprep.subr.mxu0 %v1249
        %1635 = vmatpush1.msra.mxu0 %v1248
        %1636 = vmatprep.subr.mxu0 %v1253
        %1637 = vmatpush1.msra.mxu0 %v1252
        %1638 = vmatprep.subr.mxu0 %v1257
        %1639 = vmatpush1.msra.mxu0 %v1256
        %1640 = vmatprep.subr.mxu0 %v1261
        %1641 = vmatpush1.msra.mxu0 %v1260
        %1642 = vmatprep.subr.mxu0 %v1265
        %1643 = vmatpush1.msra.mxu0 %v1264
        %1644 = vmatprep.subr.mxu0 %v1269
        %1645 = vmatpush1.msra.mxu0 %v1268
        %1646 = vmatprep.subr.mxu0 %v1273
        %1647 = vmatpush1.msra.mxu0 %v1272
        %1648 = vmatprep.subr.mxu0 %v1277
        %1649 = vmatpush1.msra.mxu0 %v1276
        %1650 = vmatprep.subr.mxu0 %v1281
        %1651 = vmatpush1.msra.mxu0 %v1280
        %1652 = vmatprep.subr.mxu0 %v1285
        %1653 = vmatpush1.msra.mxu0 %v1284
        %1654 = vmatprep.subr.mxu0 %v1289
        %1655 = vmatpush1.msra.mxu0 %v1288
        %1656 = vmatprep.subr.mxu0 %v1293
        %1657 = vmatpush1.msra.mxu0 %v1292
        %1658 = vmatprep.subr.mxu0 %v1297
        %1659 = vmatpush1.msra.mxu0 %v1296
        %1660 = vmatprep.subr.mxu0 %v1301
        %1661 = vmatpush1.msra.mxu0 %v1300
        %1662 = vmatprep.subr.mxu0 %v1305
        %1663 = vmatpush1.msra.mxu0 %v1304
        %1664 = vmatprep.mubr.f32.mxu0 %v665
        %1665 = vmatmul.mubr.f32.gmra.mrb[0].mxu0 %v664
        %v1666 = vpop.f32.mrb[0].mxu0
        %v1667 = vadd.f32 %v1596, %v1666
        %v1668 = vpop.f32.mrb[0].mxu0
        %v1669 = vadd.f32 %v1598, %v1668
        %1670 = vdwg.mxu0
        %1671 = vmatprep.subr.mxu0 %v1309
        %1672 = vmatpush1.msra.mxu0 %v1308
        %1673 = vmatprep.subr.mxu0 %v1313
        %1674 = vmatpush1.msra.mxu0 %v1312
        %1675 = vmatprep.subr.mxu0 %v1317
        %1676 = vmatpush1.msra.mxu0 %v1316
        %1677 = vmatprep.subr.mxu0 %v1321
        %1678 = vmatpush1.msra.mxu0 %v1320
        %1679 = vmatprep.subr.mxu0 %v1325
        %1680 = vmatpush1.msra.mxu0 %v1324
        %1681 = vmatprep.subr.mxu0 %v1329
        %1682 = vmatpush1.msra.mxu0 %v1328
        %1683 = vmatprep.subr.mxu0 %v1333
        %1684 = vmatpush1.msra.mxu0 %v1332
        %1685 = vmatprep.subr.mxu0 %v1337
        %1686 = vmatpush1.msra.mxu0 %v1336
        %1687 = vmatprep.subr.mxu0 %v1341
        %1688 = vmatpush1.msra.mxu0 %v1340
        %1689 = vmatprep.subr.mxu0 %v1345
        %1690 = vmatpush1.msra.mxu0 %v1344
        %1691 = vmatprep.subr.mxu0 %v1349
        %1692 = vmatpush1.msra.mxu0 %v1348
        %1693 = vmatprep.subr.mxu0 %v1353
        %1694 = vmatpush1.msra.mxu0 %v1352
        %1695 = vmatprep.subr.mxu0 %v1357
        %1696 = vmatpush1.msra.mxu0 %v1356
        %1697 = vmatprep.subr.mxu0 %v1361
        %1698 = vmatpush1.msra.mxu0 %v1360
        %1699 = vmatprep.subr.mxu0 %v1365
        %1700 = vmatpush1.msra.mxu0 %v1364
        %1701 = vmatprep.subr.mxu0 %v1369
        %1702 = vmatpush1.msra.mxu0 %v1368
        %1703 = vmatprep.subr.mxu0 %v1373
        %1704 = vmatpush1.msra.mxu0 %v1372
        %1705 = vmatprep.subr.mxu0 %v1377
        %1706 = vmatpush1.msra.mxu0 %v1376
        %1707 = vmatprep.subr.mxu0 %v1381
        %1708 = vmatpush1.msra.mxu0 %v1380
        %1709 = vmatprep.subr.mxu0 %v1385
        %1710 = vmatpush1.msra.mxu0 %v1384
        %1711 = vmatprep.subr.mxu0 %v1389
        %1712 = vmatpush1.msra.mxu0 %v1388
        %1713 = vmatprep.subr.mxu0 %v1393
        %1714 = vmatpush1.msra.mxu0 %v1392
        %1715 = vmatprep.subr.mxu0 %v1397
        %1716 = vmatpush1.msra.mxu0 %v1396
        %1717 = vmatprep.subr.mxu0 %v1401
        %1718 = vmatpush1.msra.mxu0 %v1400
        %1719 = vmatprep.subr.mxu0 %v1405
        %1720 = vmatpush1.msra.mxu0 %v1404
        %1721 = vmatprep.subr.mxu0 %v1409
        %1722 = vmatpush1.msra.mxu0 %v1408
        %1723 = vmatprep.subr.mxu0 %v1413
        %1724 = vmatpush1.msra.mxu0 %v1412
        %1725 = vmatprep.subr.mxu0 %v1417
        %1726 = vmatpush1.msra.mxu0 %v1416
        %1727 = vmatprep.subr.mxu0 %v1421
        %1728 = vmatpush1.msra.mxu0 %v1420
        %1729 = vmatprep.subr.mxu0 %v1425
        %1730 = vmatpush1.msra.mxu0 %v1424
        %1731 = vmatprep.subr.mxu0 %v1429
        %1732 = vmatpush1.msra.mxu0 %v1428
        %1733 = vmatprep.subr.mxu0 %v1433
        %1734 = vmatpush1.msra.mxu0 %v1432
        %1735 = vmatprep.mubr.f32.mxu0 %v667
        %1736 = vmatmul.mubr.f32.gmra.mrb[0].mxu0 %v666
        %v1737 = vpop.f32.mrb[0].mxu0
        %v1738 = vadd.f32 %v1667, %v1737
        %v1739 = vpop.f32.mrb[0].mxu0
        %v1740 = vadd.f32 %v1669, %v1739
        %1741 = vdwg.mxu0
        %1742 = vmatprep.subr.mxu0 %v927
        %1743 = vmatpush1.msra.mxu0 %v926
        %1744 = vmatprep.subr.mxu0 %v931
        %1745 = vmatpush1.msra.mxu0 %v930
        %1746 = vmatprep.subr.mxu0 %v935
        %1747 = vmatpush1.msra.mxu0 %v934
        %1748 = vmatprep.subr.mxu0 %v939
        %1749 = vmatpush1.msra.mxu0 %v938
        %1750 = vmatprep.subr.mxu0 %v943
        %1751 = vmatpush1.msra.mxu0 %v942
        %1752 = vmatprep.subr.mxu0 %v947
        %1753 = vmatpush1.msra.mxu0 %v946
        %1754 = vmatprep.subr.mxu0 %v951
        %1755 = vmatpush1.msra.mxu0 %v950
        %1756 = vmatprep.subr.mxu0 %v955
        %1757 = vmatpush1.msra.mxu0 %v954
        %1758 = vmatprep.subr.mxu0 %v959
        %1759 = vmatpush1.msra.mxu0 %v958
        %1760 = vmatprep.subr.mxu0 %v963
        %1761 = vmatpush1.msra.mxu0 %v962
        %1762 = vmatprep.subr.mxu0 %v967
        %1763 = vmatpush1.msra.mxu0 %v966
        %1764 = vmatprep.subr.mxu0 %v971
        %1765 = vmatpush1.msra.mxu0 %v970
        %1766 = vmatprep.subr.mxu0 %v975
        %1767 = vmatpush1.msra.mxu0 %v974
        %1768 = vmatprep.subr.mxu0 %v979
        %1769 = vmatpush1.msra.mxu0 %v978
        %1770 = vmatprep.subr.mxu0 %v983
        %1771 = vmatpush1.msra.mxu0 %v982
        %1772 = vmatprep.subr.mxu0 %v987
        %1773 = vmatpush1.msra.mxu0 %v986
        %1774 = vmatprep.subr.mxu0 %v991
        %1775 = vmatpush1.msra.mxu0 %v990
        %1776 = vmatprep.subr.mxu0 %v995
        %1777 = vmatpush1.msra.mxu0 %v994
        %1778 = vmatprep.subr.mxu0 %v999
        %1779 = vmatpush1.msra.mxu0 %v998
        %1780 = vmatprep.subr.mxu0 %v1003
        %1781 = vmatpush1.msra.mxu0 %v1002
        %1782 = vmatprep.subr.mxu0 %v1007
        %1783 = vmatpush1.msra.mxu0 %v1006
        %1784 = vmatprep.subr.mxu0 %v1011
        %1785 = vmatpush1.msra.mxu0 %v1010
        %1786 = vmatprep.subr.mxu0 %v1015
        %1787 = vmatpush1.msra.mxu0 %v1014
        %1788 = vmatprep.subr.mxu0 %v1019
        %1789 = vmatpush1.msra.mxu0 %v1018
        %1790 = vmatprep.subr.mxu0 %v1023
        %1791 = vmatpush1.msra.mxu0 %v1022
        %1792 = vmatprep.subr.mxu0 %v1027
        %1793 = vmatpush1.msra.mxu0 %v1026
        %1794 = vmatprep.subr.mxu0 %v1031
        %1795 = vmatpush1.msra.mxu0 %v1030
        %1796 = vmatprep.subr.mxu0 %v1035
        %1797 = vmatpush1.msra.mxu0 %v1034
        %1798 = vmatprep.subr.mxu0 %v1039
        %1799 = vmatpush1.msra.mxu0 %v1038
        %1800 = vmatprep.subr.mxu0 %v1043
        %1801 = vmatpush1.msra.mxu0 %v1042
        %1802 = vmatprep.subr.mxu0 %v1047
        %1803 = vmatpush1.msra.mxu0 %v1046
        %1804 = vmatprep.subr.mxu0 %v1051
        %1805 = vmatpush1.msra.mxu0 %v1050
        %1806 = vmatprep.mubr.f32.mxu0 %v661
        %1807 = vmatmul.mubr.f32.gmra.mrb[0].mxu0 %v660
        %v1808 = vpop.f32.mrb[0].mxu0
        %v1809 = vadd.f32 %v1449, %v1808
        %v1810 = vpop.f32.mrb[0].mxu0
        %v1811 = vadd.f32 %v1453, %v1810
        %1812 = vdwg.mxu0
        %1813 = vmatprep.subr.mxu0 %v1055
        %1814 = vmatpush1.msra.mxu0 %v1054
        %1815 = vmatprep.subr.mxu0 %v1059
        %1816 = vmatpush1.msra.mxu0 %v1058
        %1817 = vmatprep.subr.mxu0 %v1063
        %1818 = vmatpush1.msra.mxu0 %v1062
        %1819 = vmatprep.subr.mxu0 %v1067
        %1820 = vmatpush1.msra.mxu0 %v1066
        %1821 = vmatprep.subr.mxu0 %v1071
        %1822 = vmatpush1.msra.mxu0 %v1070
        %1823 = vmatprep.subr.mxu0 %v1075
        %1824 = vmatpush1.msra.mxu0 %v1074
        %1825 = vmatprep.subr.mxu0 %v1079
        %1826 = vmatpush1.msra.mxu0 %v1078
        %1827 = vmatprep.subr.mxu0 %v1083
        %1828 = vmatpush1.msra.mxu0 %v1082
        %1829 = vmatprep.subr.mxu0 %v1087
        %1830 = vmatpush1.msra.mxu0 %v1086
        %1831 = vmatprep.subr.mxu0 %v1091
        %1832 = vmatpush1.msra.mxu0 %v1090
        %1833 = vmatprep.subr.mxu0 %v1095
        %1834 = vmatpush1.msra.mxu0 %v1094
        %1835 = vmatprep.subr.mxu0 %v1099
        %1836 = vmatpush1.msra.mxu0 %v1098
        %1837 = vmatprep.subr.mxu0 %v1103
        %1838 = vmatpush1.msra.mxu0 %v1102
        %1839 = vmatprep.subr.mxu0 %v1107
        %1840 = vmatpush1.msra.mxu0 %v1106
        %1841 = vmatprep.subr.mxu0 %v1111
        %1842 = vmatpush1.msra.mxu0 %v1110
        %1843 = vmatprep.subr.mxu0 %v1115
        %1844 = vmatpush1.msra.mxu0 %v1114
        %1845 = vmatprep.subr.mxu0 %v1119
        %1846 = vmatpush1.msra.mxu0 %v1118
        %1847 = vmatprep.subr.mxu0 %v1123
        %1848 = vmatpush1.msra.mxu0 %v1122
        %1849 = vmatprep.subr.mxu0 %v1127
        %1850 = vmatpush1.msra.mxu0 %v1126
        %1851 = vmatprep.subr.mxu0 %v1131
        %1852 = vmatpush1.msra.mxu0 %v1130
        %1853 = vmatprep.subr.mxu0 %v1135
        %1854 = vmatpush1.msra.mxu0 %v1134
        %1855 = vmatprep.subr.mxu0 %v1139
        %1856 = vmatpush1.msra.mxu0 %v1138
        %1857 = vmatprep.subr.mxu0 %v1143
        %1858 = vmatpush1.msra.mxu0 %v1142
        %1859 = vmatprep.subr.mxu0 %v1147
        %1860 = vmatpush1.msra.mxu0 %v1146
        %1861 = vmatprep.subr.mxu0 %v1151
        %1862 = vmatpush1.msra.mxu0 %v1150
        %1863 = vmatprep.subr.mxu0 %v1155
        %1864 = vmatpush1.msra.mxu0 %v1154
        %1865 = vmatprep.subr.mxu0 %v1159
        %1866 = vmatpush1.msra.mxu0 %v1158
        %1867 = vmatprep.subr.mxu0 %v1163
        %1868 = vmatpush1.msra.mxu0 %v1162
        %1869 = vmatprep.subr.mxu0 %v1167
        %1870 = vmatpush1.msra.mxu0 %v1166
        %1871 = vmatprep.subr.mxu0 %v1171
        %1872 = vmatpush1.msra.mxu0 %v1170
        %1873 = vmatprep.subr.mxu0 %v1175
        %1874 = vmatpush1.msra.mxu0 %v1174
        %1875 = vmatprep.subr.mxu0 %v1179
        %1876 = vmatpush1.msra.mxu0 %v1178
        %1877 = vmatprep.mubr.f32.mxu0 %v663
        %1878 = vmatmul.mubr.f32.gmra.mrb[0].mxu0 %v662
        %v1879 = vpop.f32.mrb[0].mxu0
        %v1880 = vadd.f32 %v1809, %v1879
        %v1881 = vpop.f32.mrb[0].mxu0
        %v1882 = vadd.f32 %v1811, %v1881
        %1883 = vdwg.mxu0
        %1884 = vmatprep.subr.mxu0 %v1183
        %1885 = vmatpush1.msra.mxu0 %v1182
        %1886 = vmatprep.subr.mxu0 %v1187
        %1887 = vmatpush1.msra.mxu0 %v1186
        %1888 = vmatprep.subr.mxu0 %v1191
        %1889 = vmatpush1.msra.mxu0 %v1190
        %1890 = vmatprep.subr.mxu0 %v1195
        %1891 = vmatpush1.msra.mxu0 %v1194
        %1892 = vmatprep.subr.mxu0 %v1199
        %1893 = vmatpush1.msra.mxu0 %v1198
        %1894 = vmatprep.subr.mxu0 %v1203
        %1895 = vmatpush1.msra.mxu0 %v1202
        %1896 = vmatprep.subr.mxu0 %v1207
        %1897 = vmatpush1.msra.mxu0 %v1206
        %1898 = vmatprep.subr.mxu0 %v1211
        %1899 = vmatpush1.msra.mxu0 %v1210
        %1900 = vmatprep.subr.mxu0 %v1215
        %1901 = vmatpush1.msra.mxu0 %v1214
        %1902 = vmatprep.subr.mxu0 %v1219
        %1903 = vmatpush1.msra.mxu0 %v1218
        %1904 = vmatprep.subr.mxu0 %v1223
        %1905 = vmatpush1.msra.mxu0 %v1222
        %1906 = vmatprep.subr.mxu0 %v1227
        %1907 = vmatpush1.msra.mxu0 %v1226
        %1908 = vmatprep.subr.mxu0 %v1231
        %1909 = vmatpush1.msra.mxu0 %v1230
        %1910 = vmatprep.subr.mxu0 %v1235
        %1911 = vmatpush1.msra.mxu0 %v1234
        %1912 = vmatprep.subr.mxu0 %v1239
        %1913 = vmatpush1.msra.mxu0 %v1238
        %1914 = vmatprep.subr.mxu0 %v1243
        %1915 = vmatpush1.msra.mxu0 %v1242
        %1916 = vmatprep.subr.mxu0 %v1247
        %1917 = vmatpush1.msra.mxu0 %v1246
        %1918 = vmatprep.subr.mxu0 %v1251
        %1919 = vmatpush1.msra.mxu0 %v1250
        %1920 = vmatprep.subr.mxu0 %v1255
        %1921 = vmatpush1.msra.mxu0 %v1254
        %1922 = vmatprep.subr.mxu0 %v1259
        %1923 = vmatpush1.msra.mxu0 %v1258
        %1924 = vmatprep.subr.mxu0 %v1263
        %1925 = vmatpush1.msra.mxu0 %v1262
        %1926 = vmatprep.subr.mxu0 %v1267
        %1927 = vmatpush1.msra.mxu0 %v1266
        %1928 = vmatprep.subr.mxu0 %v1271
        %1929 = vmatpush1.msra.mxu0 %v1270
        %1930 = vmatprep.subr.mxu0 %v1275
        %1931 = vmatpush1.msra.mxu0 %v1274
        %1932 = vmatprep.subr.mxu0 %v1279
        %1933 = vmatpush1.msra.mxu0 %v1278
        %1934 = vmatprep.subr.mxu0 %v1283
        %1935 = vmatpush1.msra.mxu0 %v1282
        %1936 = vmatprep.subr.mxu0 %v1287
        %1937 = vmatpush1.msra.mxu0 %v1286
        %1938 = vmatprep.subr.mxu0 %v1291
        %1939 = vmatpush1.msra.mxu0 %v1290
        %1940 = vmatprep.subr.mxu0 %v1295
        %1941 = vmatpush1.msra.mxu0 %v1294
        %1942 = vmatprep.subr.mxu0 %v1299
        %1943 = vmatpush1.msra.mxu0 %v1298
        %1944 = vmatprep.subr.mxu0 %v1303
        %1945 = vmatpush1.msra.mxu0 %v1302
        %1946 = vmatprep.subr.mxu0 %v1307
        %1947 = vmatpush1.msra.mxu0 %v1306
        %1948 = vmatprep.mubr.f32.mxu0 %v665
        %1949 = vmatmul.mubr.f32.gmra.mrb[0].mxu0 %v664
        %v1950 = vpop.f32.mrb[0].mxu0
        %v1951 = vadd.f32 %v1880, %v1950
        %v1952 = vpop.f32.mrb[0].mxu0
        %v1953 = vadd.f32 %v1882, %v1952
        %1954 = vdwg.mxu0
        %1955 = vmatprep.subr.mxu0 %v1311
        %1956 = vmatpush1.msra.mxu0 %v1310
        %1957 = vmatprep.subr.mxu0 %v1315
        %1958 = vmatpush1.msra.mxu0 %v1314
        %1959 = vmatprep.subr.mxu0 %v1319
        %1960 = vmatpush1.msra.mxu0 %v1318
        %1961 = vmatprep.subr.mxu0 %v1323
        %1962 = vmatpush1.msra.mxu0 %v1322
        %1963 = vmatprep.subr.mxu0 %v1327
        %1964 = vmatpush1.msra.mxu0 %v1326
        %1965 = vmatprep.subr.mxu0 %v1331
        %1966 = vmatpush1.msra.mxu0 %v1330
        %1967 = vmatprep.subr.mxu0 %v1335
        %1968 = vmatpush1.msra.mxu0 %v1334
        %1969 = vmatprep.subr.mxu0 %v1339
        %1970 = vmatpush1.msra.mxu0 %v1338
        %1971 = vmatprep.subr.mxu0 %v1343
        %1972 = vmatpush1.msra.mxu0 %v1342
        %1973 = vmatprep.subr.mxu0 %v1347
        %1974 = vmatpush1.msra.mxu0 %v1346
        %1975 = vmatprep.subr.mxu0 %v1351
        %1976 = vmatpush1.msra.mxu0 %v1350
        %1977 = vmatprep.subr.mxu0 %v1355
        %1978 = vmatpush1.msra.mxu0 %v1354
        %1979 = vmatprep.subr.mxu0 %v1359
        %1980 = vmatpush1.msra.mxu0 %v1358
        %1981 = vmatprep.subr.mxu0 %v1363
        %1982 = vmatpush1.msra.mxu0 %v1362
        %1983 = vmatprep.subr.mxu0 %v1367
        %1984 = vmatpush1.msra.mxu0 %v1366
        %1985 = vmatprep.subr.mxu0 %v1371
        %1986 = vmatpush1.msra.mxu0 %v1370
        %1987 = vmatprep.subr.mxu0 %v1375
        %1988 = vmatpush1.msra.mxu0 %v1374
        %1989 = vmatprep.subr.mxu0 %v1379
        %1990 = vmatpush1.msra.mxu0 %v1378
        %1991 = vmatprep.subr.mxu0 %v1383
        %1992 = vmatpush1.msra.mxu0 %v1382
        %1993 = vmatprep.subr.mxu0 %v1387
        %1994 = vmatpush1.msra.mxu0 %v1386
        %1995 = vmatprep.subr.mxu0 %v1391
        %1996 = vmatpush1.msra.mxu0 %v1390
        %1997 = vmatprep.subr.mxu0 %v1395
        %1998 = vmatpush1.msra.mxu0 %v1394
        %1999 = vmatprep.subr.mxu0 %v1399
        %2000 = vmatpush1.msra.mxu0 %v1398
        %2001 = vmatprep.subr.mxu0 %v1403
        %2002 = vmatpush1.msra.mxu0 %v1402
        %2003 = vmatprep.subr.mxu0 %v1407
        %2004 = vmatpush1.msra.mxu0 %v1406
        %2005 = vmatprep.subr.mxu0 %v1411
        %2006 = vmatpush1.msra.mxu0 %v1410
        %2007 = vmatprep.subr.mxu0 %v1415
        %2008 = vmatpush1.msra.mxu0 %v1414
        %2009 = vmatprep.subr.mxu0 %v1419
        %2010 = vmatpush1.msra.mxu0 %v1418
        %2011 = vmatprep.subr.mxu0 %v1423
        %2012 = vmatpush1.msra.mxu0 %v1422
        %2013 = vmatprep.subr.mxu0 %v1427
        %2014 = vmatpush1.msra.mxu0 %v1426
        %2015 = vmatprep.subr.mxu0 %v1431
        %2016 = vmatpush1.msra.mxu0 %v1430
        %2017 = vmatprep.subr.mxu0 %v1435
        %2018 = vmatpush1.msra.mxu0 %v1434
        %2019 = vmatprep.mubr.f32.mxu0 %v667
        %2020 = vmatmul.mubr.f32.gmra.mrb[0].mxu0 %v666
        %v2021 = vpop.f32.mrb[0].mxu0
        %v2022 = vadd.f32 %v1951, %v2021
        %v2023 = vpop.f32.mrb[0].mxu0
        %v2024 = vadd.f32 %v1953, %v2023
        %2025 = vdwg.mxu0
        %v2026 = vrot.slane %v1738, 4
        %v2027 = vadd.f32 %v1738, %v2026
        %v2028 = vrot.slane %v2027, 2
        %v2029 = vadd.f32 %v2027, %v2028
        %v2030 = vrot.slane %v2029, 1
        %v2031 = vadd.f32 %v2029, %v2030
        %v2032 = vrot.slane %v1740, 4
        %v2033 = vadd.f32 %v1740, %v2032
        %v2034 = vrot.slane %v2033, 2
        %v2035 = vadd.f32 %v2033, %v2034
        %v2036 = vrot.slane %v2035, 1
        %v2037 = vadd.f32 %v2035, %v2036
        %v2038 = vrot.slane %v2022, 4
        %v2039 = vadd.f32 %v2022, %v2038
        %v2040 = vrot.slane %v2039, 2
        %v2041 = vadd.f32 %v2039, %v2040
        %v2042 = vrot.slane %v2041, 1
        %v2043 = vadd.f32 %v2041, %v2042
        %v2044 = vrot.slane %v2024, 4
        %v2045 = vadd.f32 %v2024, %v2044
        %v2046 = vrot.slane %v2045, 2
        %v2047 = vadd.f32 %v2045, %v2046
        %v2048 = vrot.slane %v2047, 1
        %v2049 = vadd.f32 %v2047, %v2048
        %v2050 = vrcp.pop 8.0
        %v2051 = vmul.f32 %v2031, %v2050
        %v2052 = vmul.f32 %v2037, %v2050
        %v2053 = vmul.f32 %v2043, %v2050
        %v2054 = vmul.f32 %v2049, %v2050
        %v2055 = vsub.f32 %v1738, %v2051
        %v2056 = vsub.f32 %v1740, %v2052
        %v2057 = vsub.f32 %v2022, %v2053
        %v2058 = vsub.f32 %v2024, %v2054
        %v2059 = vmul.f32 %v2055, %v2055
        %v2060 = vmul.f32 %v2056, %v2056
        %v2061 = vmul.f32 %v2057, %v2057
        %v2062 = vmul.f32 %v2058, %v2058
        %v2063 = vrot.slane %v2059, 4
        %v2064 = vadd.f32 %v2059, %v2063
        %v2065 = vrot.slane %v2064, 2
        %v2066 = vadd.f32 %v2064, %v2065
        %v2067 = vrot.slane %v2066, 1
        %v2068 = vadd.f32 %v2066, %v2067
        %v2069 = vrot.slane %v2060, 4
        %v2070 = vadd.f32 %v2060, %v2069
        %v2071 = vrot.slane %v2070, 2
        %v2072 = vadd.f32 %v2070, %v2071
        %v2073 = vrot.slane %v2072, 1
        %v2074 = vadd.f32 %v2072, %v2073
        %v2075 = vrot.slane %v2061, 4
        %v2076 = vadd.f32 %v2061, %v2075
        %v2077 = vrot.slane %v2076, 2
        %v2078 = vadd.f32 %v2076, %v2077
        %v2079 = vrot.slane %v2078, 1
        %v2080 = vadd.f32 %v2078, %v2079
        %v2081 = vrot.slane %v2062, 4
        %v2082 = vadd.f32 %v2062, %v2081
        %v2083 = vrot.slane %v2082, 2
        %v2084 = vadd.f32 %v2082, %v2083
        %v2085 = vrot.slane %v2084, 1
        %v2086 = vadd.f32 %v2084, %v2085
        %v2087 = vmul.f32 %v2068, %v2050
        %v2088 = vmul.f32 %v2074, %v2050
        %v2089 = vmul.f32 %v2080, %v2050
        %v2090 = vmul.f32 %v2086, %v2050
        %v2091 = vadd.f32 %v2087, 1e-05
        %v2092 = vadd.f32 %v2088, 1e-05
        %v2093 = vadd.f32 %v2089, 1e-05
        %v2094 = vadd.f32 %v2090, 1e-05
        %v2095 = vrsqrt.pop %v2091
        %v2096 = vrsqrt.pop %v2092
        %v2097 = vrsqrt.pop %v2093
        %v2098 = vrsqrt.pop %v2094
        %v2099 = vmul.f32 %v2055, %v2095
        %v2100 = vmul.f32 %v2056, %v2096
        %v2101 = vmul.f32 %v2057, %v2097
        %v2102 = vmul.f32 %v2058, %v2098
        %v2103 = vmax.f32 %v2099, 0.0
        %v2104 = vmax.f32 %v2100, 0.0
        %v2105 = vmax.f32 %v2101, 0.0
        %v2106 = vmax.f32 %v2102, 0.0
        %v2107 = vld [vmem:[%s528] sm:$0xf]
        %v2108 = vld [vmem:[%s528 + $0x4] sm:$0xf]
        %v2109 = vld [vmem:[%s528 + $0x8] sm:$0xf]
        %v2110 = vld [vmem:[%s528 + $0xc] sm:$0xf]
        %v2111 = vld [vmem:[%s528 + $0x10] sm:$0xf]
        %v2112 = vld [vmem:[%s528 + $0x14] sm:$0xf]
        %v2113 = vld [vmem:[%s528 + $0x18] sm:$0xf]
        %v2114 = vld [vmem:[%s528 + $0x1c] sm:$0xf]
        %v2115 = vld [vmem:[%s528 + $0x20] sm:$0xf]
        %v2116 = vld [vmem:[%s528 + $0x24] sm:$0xf]
        %v2117 = vld [vmem:[%s528 + $0x28] sm:$0xf]
        %v2118 = vld [vmem:[%s528 + $0x2c] sm:$0xf]
        %v2119 = vld [vmem:[%s528 + $0x30] sm:$0xf]
        %v2120 = vld [vmem:[%s528 + $0x34] sm:$0xf]
        %v2121 = vld [vmem:[%s528 + $0x38] sm:$0xf]
        %v2122 = vld [vmem:[%s528 + $0x3c] sm:$0xf]
        %v2123 = vld [vmem:[%s528 + $0x40] sm:$0xf]
        %v2124 = vld [vmem:[%s528 + $0x44] sm:$0xf]
        %v2125 = vld [vmem:[%s528 + $0x48] sm:$0xf]
        %v2126 = vld [vmem:[%s528 + $0x4c] sm:$0xf]
        %v2127 = vld [vmem:[%s528 + $0x50] sm:$0xf]
        %v2128 = vld [vmem:[%s528 + $0x54] sm:$0xf]
        %v2129 = vld [vmem:[%s528 + $0x58] sm:$0xf]
        %v2130 = vld [vmem:[%s528 + $0x5c] sm:$0xf]
        %v2131 = vld [vmem:[%s528 + $0x60] sm:$0xf]
        %v2132 = vld [vmem:[%s528 + $0x64] sm:$0xf]
        %v2133 = vld [vmem:[%s528 + $0x68] sm:$0xf]
        %v2134 = vld [vmem:[%s528 + $0x6c] sm:$0xf]
        %v2135 = vld [vmem:[%s528 + $0x70] sm:$0xf]
        %v2136 = vld [vmem:[%s528 + $0x74] sm:$0xf]
        %v2137 = vld [vmem:[%s528 + $0x78] sm:$0xf]
        %v2138 = vld [vmem:[%s528 + $0x7c] sm:$0xf]
        %v2139 = vld [vmem:[%s528 + $0x80] sm:$0xf]
        %v2140 = vld [vmem:[%s528 + $0x84] sm:$0xf]
        %v2141 = vld [vmem:[%s528 + $0x88] sm:$0xf]
        %v2142 = vld [vmem:[%s528 + $0x8c] sm:$0xf]
        %v2143 = vld [vmem:[%s528 + $0x90] sm:$0xf]
        %v2144 = vld [vmem:[%s528 + $0x94] sm:$0xf]
        %v2145 = vld [vmem:[%s528 + $0x98] sm:$0xf]
        %v2146 = vld [vmem:[%s528 + $0x9c] sm:$0xf]
        %v2147 = vld [vmem:[%s528 + $0xa0] sm:$0xf]
        %v2148 = vld [vmem:[%s528 + $0xa4] sm:$0xf]
        %v2149 = vld [vmem:[%s528 + $0xa8] sm:$0xf]
        %v2150 = vld [vmem:[%s528 + $0xac] sm:$0xf]
        %v2151 = vld [vmem:[%s528 + $0xb0] sm:$0xf]
        %v2152 = vld [vmem:[%s528 + $0xb4] sm:$0xf]
        %v2153 = vld [vmem:[%s528 + $0xb8] sm:$0xf]
        %v2154 = vld [vmem:[%s528 + $0xbc] sm:$0xf]
        %v2155 = vld [vmem:[%s528 + $0xc0] sm:$0xf]
        %v2156 = vld [vmem:[%s528 + $0xc4] sm:$0xf]
        %v2157 = vld [vmem:[%s528 + $0xc8] sm:$0xf]
        %v2158 = vld [vmem:[%s528 + $0xcc] sm:$0xf]
        %v2159 = vld [vmem:[%s528 + $0xd0] sm:$0xf]
        %v2160 = vld [vmem:[%s528 + $0xd4] sm:$0xf]
        %v2161 = vld [vmem:[%s528 + $0xd8] sm:$0xf]
        %v2162 = vld [vmem:[%s528 + $0xdc] sm:$0xf]
        %v2163 = vld [vmem:[%s528 + $0xe0] sm:$0xf]
        %v2164 = vld [vmem:[%s528 + $0xe4] sm:$0xf]
        %v2165 = vld [vmem:[%s528 + $0xe8] sm:$0xf]
        %v2166 = vld [vmem:[%s528 + $0xec] sm:$0xf]
        %v2167 = vld [vmem:[%s528 + $0xf0] sm:$0xf]
        %v2168 = vld [vmem:[%s528 + $0xf4] sm:$0xf]
        %v2169 = vld [vmem:[%s528 + $0xf8] sm:$0xf]
        %v2170 = vld [vmem:[%s528 + $0xfc] sm:$0xf]
        %v2171 = vunpack.c.l.bf16 %v2107
        %v2172 = vunpack.c.l.bf16 %v2108
        %v2173 = vunpack.c.l.bf16 %v2109
        %v2174 = vunpack.c.l.bf16 %v2110
        %v2175 = vunpack.c.l.bf16 %v2111
        %v2176 = vunpack.c.l.bf16 %v2112
        %v2177 = vunpack.c.l.bf16 %v2113
        %v2178 = vunpack.c.l.bf16 %v2114
        %v2179 = vunpack.c.l.bf16 %v2115
        %v2180 = vunpack.c.l.bf16 %v2116
        %v2181 = vunpack.c.l.bf16 %v2117
        %v2182 = vunpack.c.l.bf16 %v2118
        %v2183 = vunpack.c.l.bf16 %v2119
        %v2184 = vunpack.c.l.bf16 %v2120
        %v2185 = vunpack.c.l.bf16 %v2121
        %v2186 = vunpack.c.l.bf16 %v2122
        %v2187 = vunpack.c.l.bf16 %v2123
        %v2188 = vunpack.c.l.bf16 %v2124
        %v2189 = vunpack.c.l.bf16 %v2125
        %v2190 = vunpack.c.l.bf16 %v2126
        %v2191 = vunpack.c.l.bf16 %v2127
        %v2192 = vunpack.c.l.bf16 %v2128
        %v2193 = vunpack.c.l.bf16 %v2129
        %v2194 = vunpack.c.l.bf16 %v2130
        %v2195 = vunpack.c.l.bf16 %v2131
        %v2196 = vunpack.c.l.bf16 %v2132
        %v2197 = vunpack.c.l.bf16 %v2133
        %v2198 = vunpack.c.l.bf16 %v2134
        %v2199 = vunpack.c.l.bf16 %v2135
        %v2200 = vunpack.c.l.bf16 %v2136
        %v2201 = vunpack.c.l.bf16 %v2137
        %v2202 = vunpack.c.l.bf16 %v2138
        %v2203 = vunpack.c.l.bf16 %v2139
        %v2204 = vunpack.c.l.bf16 %v2140
        %v2205 = vunpack.c.l.bf16 %v2141
        %v2206 = vunpack.c.l.bf16 %v2142
        %v2207 = vunpack.c.l.bf16 %v2143
        %v2208 = vunpack.c.l.bf16 %v2144
        %v2209 = vunpack.c.l.bf16 %v2145
        %v2210 = vunpack.c.l.bf16 %v2146
        %v2211 = vunpack.c.l.bf16 %v2147
        %v2212 = vunpack.c.l.bf16 %v2148
        %v2213 = vunpack.c.l.bf16 %v2149
        %v2214 = vunpack.c.l.bf16 %v2150
        %v2215 = vunpack.c.l.bf16 %v2151
        %v2216 = vunpack.c.l.bf16 %v2152
        %v2217 = vunpack.c.l.bf16 %v2153
        %v2218 = vunpack.c.l.bf16 %v2154
        %v2219 = vunpack.c.l.bf16 %v2155
        %v2220 = vunpack.c.l.bf16 %v2156
        %v2221 = vunpack.c.l.bf16 %v2157
        %v2222 = vunpack.c.l.bf16 %v2158
        %v2223 = vunpack.c.l.bf16 %v2159
        %v2224 = vunpack.c.l.bf16 %v2160
        %v2225 = vunpack.c.l.bf16 %v2161
        %v2226 = vunpack.c.l.bf16 %v2162
        %v2227 = vunpack.c.l.bf16 %v2163
        %v2228 = vunpack.c.l.bf16 %v2164
        %v2229 = vunpack.c.l.bf16 %v2165
        %v2230 = vunpack.c.l.bf16 %v2166
        %v2231 = vunpack.c.l.bf16 %v2167
        %v2232 = vunpack.c.l.bf16 %v2168
        %v2233 = vunpack.c.l.bf16 %v2169
        %v2234 = vunpack.c.l.bf16 %v2170
        %v2235 = vld [vmem:[%s536] sm:$0x1]
        %v2237 = vlaneseq
        %v2238 = vshrl.u32 %v2237, 7
        %v2239 = vsub.s32 0, %v2238
        %v2240 = vrot.slane %v2235, %v2239
        %2242 = vmatprep.subr.mxu0 0.0
        %2243 = vmatpush1.msra.mxu0 %v2171
        %2244 = vmatprep.subr.mxu0 0.0
        %2245 = vmatpush1.msra.mxu0 %v2172
        %2246 = vmatprep.subr.mxu0 0.0
        %2247 = vmatpush1.msra.mxu0 %v2173
        %2248 = vmatprep.subr.mxu0 0.0
        %2249 = vmatpush1.msra.mxu0 %v2174
        %2250 = vmatprep.subr.mxu0 0.0
        %2251 = vmatpush1.msra.mxu0 %v2175
        %2252 = vmatprep.subr.mxu0 0.0
        %2253 = vmatpush1.msra.mxu0 %v2176
        %2254 = vmatprep.subr.mxu0 0.0
        %2255 = vmatpush1.msra.mxu0 %v2177
        %2256 = vmatprep.subr.mxu0 0.0
        %2257 = vmatpush1.msra.mxu0 %v2178
        %2258 = vmatprep.subr.mxu0 0.0
        %2259 = vmatpush1.msra.mxu0 %v2179
        %2260 = vmatprep.subr.mxu0 0.0
        %2261 = vmatpush1.msra.mxu0 %v2180
        %2262 = vmatprep.subr.mxu0 0.0
        %2263 = vmatpush1.msra.mxu0 %v2181
        %2264 = vmatprep.subr.mxu0 0.0
        %2265 = vmatpush1.msra.mxu0 %v2182
        %2266 = vmatprep.subr.mxu0 0.0
        %2267 = vmatpush1.msra.mxu0 %v2183
        %2268 = vmatprep.subr.mxu0 0.0
        %2269 = vmatpush1.msra.mxu0 %v2184
        %2270 = vmatprep.subr.mxu0 0.0
        %2271 = vmatpush1.msra.mxu0 %v2185
        %2272 = vmatprep.subr.mxu0 0.0
        %2273 = vmatpush1.msra.mxu0 %v2186
        %2274 = vmatprep.subr.mxu0 0.0
        %2275 = vmatpush1.msra.mxu0 %v2187
        %2276 = vmatprep.subr.mxu0 0.0
        %2277 = vmatpush1.msra.mxu0 %v2188
        %2278 = vmatprep.subr.mxu0 0.0
        %2279 = vmatpush1.msra.mxu0 %v2189
        %2280 = vmatprep.subr.mxu0 0.0
        %2281 = vmatpush1.msra.mxu0 %v2190
        %2282 = vmatprep.subr.mxu0 0.0
        %2283 = vmatpush1.msra.mxu0 %v2191
        %2284 = vmatprep.subr.mxu0 0.0
        %2285 = vmatpush1.msra.mxu0 %v2192
        %2286 = vmatprep.subr.mxu0 0.0
        %2287 = vmatpush1.msra.mxu0 %v2193
        %2288 = vmatprep.subr.mxu0 0.0
        %2289 = vmatpush1.msra.mxu0 %v2194
        %2290 = vmatprep.subr.mxu0 0.0
        %2291 = vmatpush1.msra.mxu0 %v2195
        %2292 = vmatprep.subr.mxu0 0.0
        %2293 = vmatpush1.msra.mxu0 %v2196
        %2294 = vmatprep.subr.mxu0 0.0
        %2295 = vmatpush1.msra.mxu0 %v2197
        %2296 = vmatprep.subr.mxu0 0.0
        %2297 = vmatpush1.msra.mxu0 %v2198
        %2298 = vmatprep.subr.mxu0 0.0
        %2299 = vmatpush1.msra.mxu0 %v2199
        %2300 = vmatprep.subr.mxu0 0.0
        %2301 = vmatpush1.msra.mxu0 %v2200
        %2302 = vmatprep.subr.mxu0 0.0
        %2303 = vmatpush1.msra.mxu0 %v2201
        %2304 = vmatprep.subr.mxu0 0.0
        %2305 = vmatpush1.msra.mxu0 %v2202
        %2306 = vmatprep.mubr.f32.mxu0 %v2104
        %2307 = vmatmul.mubr.f32.gmra.mrb[0].mxu0 %v2103
        %v2308 = vpop.f32.mrb[0].mxu0
        %v2309 = vadd.f32 %v2240, %v2308
        %v2310 = vpop.f32.mrb[0].mxu0
        %2311 = vdwg.mxu0
        %2312 = vmatprep.subr.mxu0 0.0
        %2313 = vmatpush1.msra.mxu0 %v2203
        %2314 = vmatprep.subr.mxu0 0.0
        %2315 = vmatpush1.msra.mxu0 %v2204
        %2316 = vmatprep.subr.mxu0 0.0
        %2317 = vmatpush1.msra.mxu0 %v2205
        %2318 = vmatprep.subr.mxu0 0.0
        %2319 = vmatpush1.msra.mxu0 %v2206
        %2320 = vmatprep.subr.mxu0 0.0
        %2321 = vmatpush1.msra.mxu0 %v2207
        %2322 = vmatprep.subr.mxu0 0.0
        %2323 = vmatpush1.msra.mxu0 %v2208
        %2324 = vmatprep.subr.mxu0 0.0
        %2325 = vmatpush1.msra.mxu0 %v2209
        %2326 = vmatprep.subr.mxu0 0.0
        %2327 = vmatpush1.msra.mxu0 %v2210
        %2328 = vmatprep.subr.mxu0 0.0
        %2329 = vmatpush1.msra.mxu0 %v2211
        %2330 = vmatprep.subr.mxu0 0.0
        %2331 = vmatpush1.msra.mxu0 %v2212
        %2332 = vmatprep.subr.mxu0 0.0
        %2333 = vmatpush1.msra.mxu0 %v2213
        %2334 = vmatprep.subr.mxu0 0.0
        %2335 = vmatpush1.msra.mxu0 %v2214
        %2336 = vmatprep.subr.mxu0 0.0
        %2337 = vmatpush1.msra.mxu0 %v2215
        %2338 = vmatprep.subr.mxu0 0.0
        %2339 = vmatpush1.msra.mxu0 %v2216
        %2340 = vmatprep.subr.mxu0 0.0
        %2341 = vmatpush1.msra.mxu0 %v2217
        %2342 = vmatprep.subr.mxu0 0.0
        %2343 = vmatpush1.msra.mxu0 %v2218
        %2344 = vmatprep.subr.mxu0 0.0
        %2345 = vmatpush1.msra.mxu0 %v2219
        %2346 = vmatprep.subr.mxu0 0.0
        %2347 = vmatpush1.msra.mxu0 %v2220
        %2348 = vmatprep.subr.mxu0 0.0
        %2349 = vmatpush1.msra.mxu0 %v2221
        %2350 = vmatprep.subr.mxu0 0.0
        %2351 = vmatpush1.msra.mxu0 %v2222
        %2352 = vmatprep.subr.mxu0 0.0
        %2353 = vmatpush1.msra.mxu0 %v2223
        %2354 = vmatprep.subr.mxu0 0.0
        %2355 = vmatpush1.msra.mxu0 %v2224
        %2356 = vmatprep.subr.mxu0 0.0
        %2357 = vmatpush1.msra.mxu0 %v2225
        %2358 = vmatprep.subr.mxu0 0.0
        %2359 = vmatpush1.msra.mxu0 %v2226
        %2360 = vmatprep.subr.mxu0 0.0
        %2361 = vmatpush1.msra.mxu0 %v2227
        %2362 = vmatprep.subr.mxu0 0.0
        %2363 = vmatpush1.msra.mxu0 %v2228
        %2364 = vmatprep.subr.mxu0 0.0
        %2365 = vmatpush1.msra.mxu0 %v2229
        %2366 = vmatprep.subr.mxu0 0.0
        %2367 = vmatpush1.msra.mxu0 %v2230
        %2368 = vmatprep.subr.mxu0 0.0
        %2369 = vmatpush1.msra.mxu0 %v2231
        %2370 = vmatprep.subr.mxu0 0.0
        %2371 = vmatpush1.msra.mxu0 %v2232
        %2372 = vmatprep.subr.mxu0 0.0
        %2373 = vmatpush1.msra.mxu0 %v2233
        %2374 = vmatprep.subr.mxu0 0.0
        %2375 = vmatpush1.msra.mxu0 %v2234
        %2376 = vmatprep.mubr.f32.mxu0 %v2106
        %2377 = vmatmul.mubr.f32.gmra.mrb[0].mxu0 %v2105
        %v2378 = vpop.f32.mrb[0].mxu0
        %v2379 = vadd.f32 %v2309, %v2378
        %v2380 = vpop.f32.mrb[0].mxu0
        %2381 = vdwg.mxu0
        %2382 = vst [vmem:[%s655] sm:$0xff] %v2379
        %v2383 = vld [vmem:[%s545] sm:$0xf]
        %v2384 = vld [vmem:[%s545 + $0x4] sm:$0xf]
        %v2385 = vld [vmem:[%s545 + $0x8] sm:$0xf]
        %v2386 = vld [vmem:[%s545 + $0xc] sm:$0xf]
        %v2387 = vld [vmem:[%s545 + $0x10] sm:$0xf]
        %v2388 = vld [vmem:[%s545 + $0x14] sm:$0xf]
        %v2389 = vld [vmem:[%s545 + $0x18] sm:$0xf]
        %v2390 = vld [vmem:[%s545 + $0x1c] sm:$0xf]
        %v2391 = vld [vmem:[%s545 + $0x20] sm:$0xf]
        %v2392 = vld [vmem:[%s545 + $0x24] sm:$0xf]
        %v2393 = vld [vmem:[%s545 + $0x28] sm:$0xf]
        %v2394 = vld [vmem:[%s545 + $0x2c] sm:$0xf]
        %v2395 = vld [vmem:[%s545 + $0x30] sm:$0xf]
        %v2396 = vld [vmem:[%s545 + $0x34] sm:$0xf]
        %v2397 = vld [vmem:[%s545 + $0x38] sm:$0xf]
        %v2398 = vld [vmem:[%s545 + $0x3c] sm:$0xf]
        %v2399 = vunpack.c.l.bf16 %v2383
        %v2400 = vunpack.c.l.bf16 %v2384
        %v2401 = vunpack.c.l.bf16 %v2385
        %v2402 = vunpack.c.l.bf16 %v2386
        %v2403 = vunpack.c.l.bf16 %v2387
        %v2404 = vunpack.c.l.bf16 %v2388
        %v2405 = vunpack.c.l.bf16 %v2389
        %v2406 = vunpack.c.l.bf16 %v2390
        %v2407 = vunpack.c.l.bf16 %v2391
        %v2408 = vunpack.c.l.bf16 %v2392
        %v2409 = vunpack.c.l.bf16 %v2393
        %v2410 = vunpack.c.l.bf16 %v2394
        %v2411 = vunpack.c.l.bf16 %v2395
        %v2412 = vunpack.c.l.bf16 %v2396
        %v2413 = vunpack.c.l.bf16 %v2397
        %v2414 = vunpack.c.l.bf16 %v2398
        %v2415 = vld [vmem:[%s553] sm:$0x1]
        %v2417 = vlaneseq
        %v2418 = vshrl.u32 %v2417, 7
        %v2419 = vsub.s32 0, %v2418
        %v2420 = vrot.slane %v2415, %v2419
        %2422 = vmatprep.subr.mxu0 0.0
        %2423 = vmatpush1.msra.mxu0 %v2399
        %2424 = vmatprep.subr.mxu0 0.0
        %2425 = vmatpush1.msra.mxu0 %v2400
        %2426 = vmatprep.subr.mxu0 0.0
        %2427 = vmatpush1.msra.mxu0 %v2401
        %2428 = vmatprep.subr.mxu0 0.0
        %2429 = vmatpush1.msra.mxu0 %v2402
        %2430 = vmatprep.subr.mxu0 0.0
        %2431 = vmatpush1.msra.mxu0 %v2403
        %2432 = vmatprep.subr.mxu0 0.0
        %2433 = vmatpush1.msra.mxu0 %v2404
        %2434 = vmatprep.subr.mxu0 0.0
        %2435 = vmatpush1.msra.mxu0 %v2405
        %2436 = vmatprep.subr.mxu0 0.0
        %2437 = vmatpush1.msra.mxu0 %v2406
        %2438 = vmatprep.subr.mxu0 0.0
        %2439 = vmatpush1.msra.mxu0 %v2407
        %2440 = vmatprep.subr.mxu0 0.0
        %2441 = vmatpush1.msra.mxu0 %v2408
        %2442 = vmatprep.subr.mxu0 0.0
        %2443 = vmatpush1.msra.mxu0 %v2409
        %2444 = vmatprep.subr.mxu0 0.0
        %2445 = vmatpush1.msra.mxu0 %v2410
        %2446 = vmatprep.subr.mxu0 0.0
        %2447 = vmatpush1.msra.mxu0 %v2411
        %2448 = vmatprep.subr.mxu0 0.0
        %2449 = vmatpush1.msra.mxu0 %v2412
        %2450 = vmatprep.subr.mxu0 0.0
        %2451 = vmatpush1.msra.mxu0 %v2413
        %2452 = vmatprep.subr.mxu0 0.0
        %2453 = vmatpush1.msra.mxu0 %v2414
        %2454 = vmatprep.subr.mxu0 0.0
        %2455 = vmatpush1.msra.mxu0 0.0
        %2456 = vmatprep.subr.mxu0 0.0
        %2457 = vmatpush1.msra.mxu0 0.0
        %2458 = vmatprep.subr.mxu0 0.0
        %2459 = vmatpush1.msra.mxu0 0.0
        %2460 = vmatprep.subr.mxu0 0.0
        %2461 = vmatpush1.msra.mxu0 0.0
        %2462 = vmatprep.subr.mxu0 0.0
        %2463 = vmatpush1.msra.mxu0 0.0
        %2464 = vmatprep.subr.mxu0 0.0
        %2465 = vmatpush1.msra.mxu0 0.0
        %2466 = vmatprep.subr.mxu0 0.0
        %2467 = vmatpush1.msra.mxu0 0.0
        %2468 = vmatprep.subr.mxu0 0.0
        %2469 = vmatpush1.msra.mxu0 0.0
        %2470 = vmatprep.subr.mxu0 0.0
        %2471 = vmatpush1.msra.mxu0 0.0
        %2472 = vmatprep.subr.mxu0 0.0
        %2473 = vmatpush1.msra.mxu0 0.0
        %2474 = vmatprep.subr.mxu0 0.0
        %2475 = vmatpush1.msra.mxu0 0.0
        %2476 = vmatprep.subr.mxu0 0.0
        %2477 = vmatpush1.msra.mxu0 0.0
        %2478 = vmatprep.subr.mxu0 0.0
        %2479 = vmatpush1.msra.mxu0 0.0
        %2480 = vmatprep.subr.mxu0 0.0
        %2481 = vmatpush1.msra.mxu0 0.0
        %2482 = vmatprep.subr.mxu0 0.0
        %2483 = vmatpush1.msra.mxu0 0.0
        %2484 = vmatprep.subr.mxu0 0.0
        %2485 = vmatpush1.msra.mxu0 0.0
        %2486 = vmatprep.mubr.f32.mxu0 0.0
        %2487 = vmatmul.mubr.f32.gmra.mrb[0].mxu0 %v2379
        %v2488 = vpop.f32.mrb[0].mxu0
        %v2489 = vadd.f32 %v2420, %v2488
        %v2490 = vpop.f32.mrb[0].mxu0
        %2491 = vdwg.mxu0
        %v2492 = vrot.slane %v2489, 4
        %v2493 = vadd.f32 %v2489, %v2492
        %v2494 = vrot.slane %v2493, 2
        %v2495 = vadd.f32 %v2493, %v2494
        %v2496 = vrot.slane %v2495, 1
        %v2497 = vadd.f32 %v2495, %v2496
        %v2498 = vmul.f32 %v2497, %v2050
        %v2499 = vsub.f32 %v2489, %v2498
        %v2500 = vmul.f32 %v2499, %v2499
        %v2501 = vrot.slane %v2500, 4
        %v2502 = vadd.f32 %v2500, %v2501
        %v2503 = vrot.slane %v2502, 2
        %v2504 = vadd.f32 %v2502, %v2503
        %v2505 = vrot.slane %v2504, 1
        %v2506 = vadd.f32 %v2504, %v2505
        %v2507 = vmul.f32 %v2506, %v2050
        %v2508 = vadd.f32 %v2507, 1e-05
        %v2509 = vrsqrt.pop %v2508
        %v2510 = vmul.f32 %v2499, %v2509
        %v2511 = vmax.f32 %v2510, 0.0
        %v2512 = vld [vmem:[%s562] sm:$0xf]
        %v2513 = vld [vmem:[%s562 + $0x4] sm:$0xf]
        %v2514 = vld [vmem:[%s562 + $0x8] sm:$0xf]
        %v2515 = vld [vmem:[%s562 + $0xc] sm:$0xf]
        %v2516 = vld [vmem:[%s562 + $0x10] sm:$0xf]
        %v2517 = vld [vmem:[%s562 + $0x14] sm:$0xf]
        %v2518 = vld [vmem:[%s562 + $0x18] sm:$0xf]
        %v2519 = vld [vmem:[%s562 + $0x1c] sm:$0xf]
        %v2520 = vld [vmem:[%s562 + $0x20] sm:$0xf]
        %v2521 = vld [vmem:[%s562 + $0x24] sm:$0xf]
        %v2522 = vld [vmem:[%s562 + $0x28] sm:$0xf]
        %v2523 = vld [vmem:[%s562 + $0x2c] sm:$0xf]
        %v2524 = vld [vmem:[%s562 + $0x30] sm:$0xf]
        %v2525 = vld [vmem:[%s562 + $0x34] sm:$0xf]
        %v2526 = vld [vmem:[%s562 + $0x38] sm:$0xf]
        %v2527 = vld [vmem:[%s562 + $0x3c] sm:$0xf]
        %v2528 = vunpack.c.l.bf16 %v2512
        %v2529 = vunpack.c.l.bf16 %v2513
        %v2530 = vunpack.c.l.bf16 %v2514
        %v2531 = vunpack.c.l.bf16 %v2515
        %v2532 = vunpack.c.l.bf16 %v2516
        %v2533 = vunpack.c.l.bf16 %v2517
        %v2534 = vunpack.c.l.bf16 %v2518
        %v2535 = vunpack.c.l.bf16 %v2519
        %v2536 = vunpack.c.l.bf16 %v2520
        %v2537 = vunpack.c.l.bf16 %v2521
        %v2538 = vunpack.c.l.bf16 %v2522
        %v2539 = vunpack.c.l.bf16 %v2523
        %v2540 = vunpack.c.l.bf16 %v2524
        %v2541 = vunpack.c.l.bf16 %v2525
        %v2542 = vunpack.c.l.bf16 %v2526
        %v2543 = vunpack.c.l.bf16 %v2527
        %v2544 = vld [vmem:[%s570] sm:$0x1]
        %v2546 = vlaneseq
        %v2547 = vshrl.u32 %v2546, 7
        %v2548 = vsub.s32 0, %v2547
        %v2549 = vrot.slane %v2544, %v2548
        %2551 = vmatprep.subr.mxu0 0.0
        %2552 = vmatpush1.msra.mxu0 %v2528
        %2553 = vmatprep.subr.mxu0 0.0
        %2554 = vmatpush1.msra.mxu0 %v2529
        %2555 = vmatprep.subr.mxu0 0.0
        %2556 = vmatpush1.msra.mxu0 %v2530
        %2557 = vmatprep.subr.mxu0 0.0
        %2558 = vmatpush1.msra.mxu0 %v2531
        %2559 = vmatprep.subr.mxu0 0.0
        %2560 = vmatpush1.msra.mxu0 %v2532
        %2561 = vmatprep.subr.mxu0 0.0
        %2562 = vmatpush1.msra.mxu0 %v2533
        %2563 = vmatprep.subr.mxu0 0.0
        %2564 = vmatpush1.msra.mxu0 %v2534
        %2565 = vmatprep.subr.mxu0 0.0
        %2566 = vmatpush1.msra.mxu0 %v2535
        %2567 = vmatprep.subr.mxu0 0.0
        %2568 = vmatpush1.msra.mxu0 %v2536
        %2569 = vmatprep.subr.mxu0 0.0
        %2570 = vmatpush1.msra.mxu0 %v2537
        %2571 = vmatprep.subr.mxu0 0.0
        %2572 = vmatpush1.msra.mxu0 %v2538
        %2573 = vmatprep.subr.mxu0 0.0
        %2574 = vmatpush1.msra.mxu0 %v2539
        %2575 = vmatprep.subr.mxu0 0.0
        %2576 = vmatpush1.msra.mxu0 %v2540
        %2577 = vmatprep.subr.mxu0 0.0
        %2578 = vmatpush1.msra.mxu0 %v2541
        %2579 = vmatprep.subr.mxu0 0.0
        %2580 = vmatpush1.msra.mxu0 %v2542
        %2581 = vmatprep.subr.mxu0 0.0
        %2582 = vmatpush1.msra.mxu0 %v2543
        %2583 = vmatprep.subr.mxu0 0.0
        %2584 = vmatpush1.msra.mxu0 0.0
        %2585 = vmatprep.subr.mxu0 0.0
        %2586 = vmatpush1.msra.mxu0 0.0
        %2587 = vmatprep.subr.mxu0 0.0
        %2588 = vmatpush1.msra.mxu0 0.0
        %2589 = vmatprep.subr.mxu0 0.0
        %2590 = vmatpush1.msra.mxu0 0.0
        %2591 = vmatprep.subr.mxu0 0.0
        %2592 = vmatpush1.msra.mxu0 0.0
        %2593 = vmatprep.subr.mxu0 0.0
        %2594 = vmatpush1.msra.mxu0 0.0
        %2595 = vmatprep.subr.mxu0 0.0
        %2596 = vmatpush1.msra.mxu0 0.0
        %2597 = vmatprep.subr.mxu0 0.0
        %2598 = vmatpush1.msra.mxu0 0.0
        %2599 = vmatprep.subr.mxu0 0.0
        %2600 = vmatpush1.msra.mxu0 0.0
        %2601 = vmatprep.subr.mxu0 0.0
        %2602 = vmatpush1.msra.mxu0 0.0
        %2603 = vmatprep.subr.mxu0 0.0
        %2604 = vmatpush1.msra.mxu0 0.0
        %2605 = vmatprep.subr.mxu0 0.0
        %2606 = vmatpush1.msra.mxu0 0.0
        %2607 = vmatprep.subr.mxu0 0.0
        %2608 = vmatpush1.msra.mxu0 0.0
        %2609 = vmatprep.subr.mxu0 0.0
        %2610 = vmatpush1.msra.mxu0 0.0
        %2611 = vmatprep.subr.mxu0 0.0
        %2612 = vmatpush1.msra.mxu0 0.0
        %2613 = vmatprep.subr.mxu0 0.0
        %2614 = vmatpush1.msra.mxu0 0.0
        %2615 = vmatprep.mubr.f32.mxu0 0.0
        %2616 = vmatmul.mubr.f32.gmra.mrb[0].mxu0 %v2511
        %v2617 = vpop.f32.mrb[0].mxu0
        %v2618 = vadd.f32 %v2549, %v2617
        %v2619 = vpop.f32.mrb[0].mxu0
        %2620 = vdwg.mxu0
        %2621 = vst [vmem:[%s659] sm:$0xff] %v2618
        %p2622 = scmp.lt.s32.totalorder %s37, 1
        %s2623 = scalar_select %p2622, %s37, 1
        %s2624 = smul.addr %s2623, 8
        %s2625 = scalar_lea.vmem %s9, %s2624
        %p2626 = scmp.lt.s32.totalorder %s37, 1
        %s2627 = scalar_select %p2626, %s37, 1
        %s2628 = smul.addr %s2627, 8
        %s2629 = scalar_lea.vmem %s10, %s2628
        // Predicated region
        $region89: #{simsiam_forward.1} parent=55 // pred_check
          %p2630 = pneg %p289
        $region90: #{simsiam_forward.1} parent=55 // pred_check_branch
          %2632 = sbr.rel (%p2630) target = $region92
        $region91: #{simsiam_forward.1} parent=55 // pred_region
          _
        $region92: #{simsiam_forward.1} parent=55 // pred_fallthru
          _
        // Predicated region
        $region93: #{simsiam_forward.1} parent=55 // pred_check
          %p2633 = pneg %p315
        $region94: #{simsiam_forward.1} parent=55 // pred_check_branch
          %2635 = sbr.rel (%p2633) target = $region96
        $region95: #{simsiam_forward.1} parent=55 // pred_region
          _
        $region96: #{simsiam_forward.1} parent=55 // pred_fallthru
          _
      $region56: #{simsiam_forward.1} parent=5 // pred_fallthru
        _
      %p2636 = scmp.le.s32.totalorder 2, %s32
      // Predicated region
      $region97: #{simsiam_forward.1} parent=5 // pred_check
        %p2637 = pneg %p2636
      $region98: #{simsiam_forward.1} parent=5 // pred_check_branch
        %2639 = sbr.rel (%p2637) target = $region100
      $region99: #{simsiam_forward.1} parent=5 // pred_region
        %s2640 = ssub.s32 %s32, 2
        // Predicated region
        $region101: #{simsiam_forward.1} parent=99 // pred_check
          %p2641 = pneg %p295
        $region102: #{simsiam_forward.1} parent=99 // pred_check_branch
          %2643 = sbr.rel (%p2641) target = $region104
        $region103: #{simsiam_forward.1} parent=99 // pred_region
          %p2644 = scmp.lt.s32.totalorder %s38, 1
          %s2645 = scalar_select %p2644, %s38, 1
          %s2646 = smul.addr %s2645, 8
          %s2647 = scalar_lea.vmem %s9, %s2646
        $region104: #{simsiam_forward.1} parent=99 // pred_fallthru
          _
        // Predicated region
        $region105: #{simsiam_forward.1} parent=99 // pred_check
          %p2648 = pneg %p321
        $region106: #{simsiam_forward.1} parent=99 // pred_check_branch
          %2650 = sbr.rel (%p2648) target = $region108
        $region107: #{simsiam_forward.1} parent=99 // pred_region
          %p2651 = scmp.lt.s32.totalorder %s38, 1
          %s2652 = scalar_select %p2651, %s38, 1
          %s2653 = smul.addr %s2652, 8
          %s2654 = scalar_lea.vmem %s10, %s2653
        $region108: #{simsiam_forward.1} parent=99 // pred_fallthru
          _
      $region100: #{simsiam_forward.1} parent=5 // pred_fallthru
        _
    $region6: #{simsiam_forward.1} parent=1 // loop_footer
      %s36 = sadd.s32 1, %s32
    $region7: #{simsiam_forward.1} parent=1 // loop_footer_branch
      %31 = sbr.rel target = $region3
    $region8: #{simsiam_forward.1} parent=1 // loop_exit
      _
    %2655 = vsyncpa [#allocation3], 1
    %s2656 = scalar_lea.sflag [#allocation3], 1
    %2657 = vsyncpa %s2656, 1
    %2658 = vsyncpa [#allocation5], 1
    %s2659 = scalar_lea.sflag [#allocation5], 1
    %2660 = vsyncpa %s2659, 1
    %2661 = vsyncpa [#allocation8], 1
    %s2662 = scalar_lea.sflag [#allocation8], 1
    %2663 = vsyncpa %s2662, 1
    %2664 = vsyncpa [#allocation11], 1
    %s2665 = scalar_lea.sflag [#allocation11], 1
    %2666 = vsyncpa %s2665, 1
    %2667 = vsyncpa [#allocation14], 1
    %s2668 = scalar_lea.sflag [#allocation14], 1
    %2669 = vsyncpa %s2668, 1

</llo_original>
